<compile_context>
chip_gen: v7x
topology: tpu7x:2x2x1
jax: 0.10.0
libtpu: 0.0.40
codegen_flags: <defaults>
</compile_context>

<pallas_src>
import math

import jax
import jax.numpy as jnp
from jax.experimental import pallas as pl
from jax.experimental.pallas import tpu as pltpu

d_model = 512
num_heads = 8
d_k = d_model // num_heads  # 64

# 32 MiB is safe on every generation (v7x scoped default is 32 MiB of its
# 64 MiB physical VMEM); all tiles below fit comfortably.
_VMEM_LIMIT = 32 * 1024 * 1024


def _mosaic_params(*sem):
    return pltpu.CompilerParams(
        dimension_semantics=sem, vmem_limit_bytes=_VMEM_LIMIT
    )


# ---------------------------------------------------------------------------
# QKV projection (general path: distinct q/k/v activations).
# Outputs: q_proj (tm,512) and kv_proj (tm,1024), both lane-dense.
# Weights are pre-transposed (and w_q pre-scaled by 1/sqrt(d_k)) in the wrapper.
# ---------------------------------------------------------------------------
def qkv_proj_kernel(xq_ref, xk_ref, xv_ref, wq_ref, wk_ref, wv_ref,
                    bq_ref, bkv_ref, q_ref, kv_ref):
    yq = jnp.dot(xq_ref[...], wq_ref[...], preferred_element_type=jnp.float32)
    q_ref[...] = (yq + bq_ref[...]).astype(q_ref.dtype)

    yk = jnp.dot(xk_ref[...], wk_ref[...], preferred_element_type=jnp.float32)
    kv_ref[:, :d_model] = (yk + bkv_ref[:, :d_model]).astype(kv_ref.dtype)

    yv = jnp.dot(xv_ref[...], wv_ref[...], preferred_element_type=jnp.float32)
    kv_ref[:, d_model:] = (yv + bkv_ref[:, d_model:]).astype(kv_ref.dtype)


def pallas_qkv_proj(q2d, k2d, v2d, wq_t, wk_t, wv_t, bq, bkv, *, tm=512):
    M = q2d.shape[0]
    tm_eff = min(tm, M)
    grid = (pl.cdiv(M, tm_eff),)
    x_spec = pl.BlockSpec((tm_eff, d_model), lambda i: (i, 0))
    w_spec = pl.BlockSpec((d_model, d_model), lambda i: (0, 0))
    return pl.pallas_call(
        qkv_proj_kernel,
        out_shape=(
            jax.ShapeDtypeStruct((M, d_model), q2d.dtype),
            jax.ShapeDtypeStruct((M, 2 * d_model), q2d.dtype),
        ),
        grid_spec=pltpu.PrefetchScalarGridSpec(
            num_scalar_prefetch=0,
            grid=grid,
            in_specs=[
                x_spec, x_spec, x_spec,
                w_spec, w_spec, w_spec,
                pl.BlockSpec((1, d_model), lambda i: (0, 0)),
                pl.BlockSpec((1, 2 * d_model), lambda i: (0, 0)),
            ],
            out_specs=(
                pl.BlockSpec((tm_eff, d_model), lambda i: (i, 0)),
                pl.BlockSpec((tm_eff, 2 * d_model), lambda i: (i, 0)),
            ),
        ),
        compiler_params=_mosaic_params("parallel"),
    )(q2d, k2d, v2d, wq_t, wk_t, wv_t, bq, bkv)


# ---------------------------------------------------------------------------
# QKV projection (self-attention fast path: q is k is v).
# One (tm,512) x (512,1536) matmul against a stacked weight; x read once.
# ---------------------------------------------------------------------------
def qkv_proj_self_kernel(x_ref, w_ref, b_ref, q_ref, kv_ref):
    y = jnp.dot(x_ref[...], w_ref[...], preferred_element_type=jnp.float32)
    y = y + b_ref[...]  # (tm, 1536) f32
    q_ref[...] = y[:, :d_model].astype(q_ref.dtype)          # lane-aligned slice
    kv_ref[...] = y[:, d_model:].astype(kv_ref.dtype)


def pallas_qkv_proj_self(x2d, w_qkv, b_qkv, *, tm=512):
    M = x2d.shape[0]
    tm_eff = min(tm, M)
    grid = (pl.cdiv(M, tm_eff),)
    return pl.pallas_call(
        qkv_proj_self_kernel,
        out_shape=(
            jax.ShapeDtypeStruct((M, d_model), x2d.dtype),
            jax.ShapeDtypeStruct((M, 2 * d_model), x2d.dtype),
        ),
        grid_spec=pltpu.PrefetchScalarGridSpec(
            num_scalar_prefetch=0,
            grid=grid,
            in_specs=[
                pl.BlockSpec((tm_eff, d_model), lambda i: (i, 0)),
                pl.BlockSpec((d_model, 3 * d_model), lambda i: (0, 0)),
                pl.BlockSpec((1, 3 * d_model), lambda i: (0, 0)),
            ],
            out_specs=(
                pl.BlockSpec((tm_eff, d_model), lambda i: (i, 0)),
                pl.BlockSpec((tm_eff, 2 * d_model), lambda i: (i, 0)),
            ),
        ),
        compiler_params=_mosaic_params("parallel"),
    )(x2d, w_qkv, b_qkv)


# ---------------------------------------------------------------------------
# Attention (all 8 heads) fused with the W_0 output projection.
# Grid = (B, q_tiles).  Blocks:
#   q_ref  : (1, tq, 512)   -- this q tile (scale already folded into w_q)
#   kv_ref : (1, L, 1024)   -- full K|V slab of batch b (resident across q tiles)
#   w0_ref : (512, 512), b0_ref : (1, 512)  -- VMEM-resident (constant index_map)
#   o_ref  : (1, tq, 512)   -- final projected output (lane-dense)
#   cat_ref: (tq, 512) VMEM scratch holding the concatenated head outputs.
# ---------------------------------------------------------------------------
def attention_w0_kernel(q_ref, kv_ref, w0_ref, b0_ref, o_ref, cat_ref):
    q_rows = q_ref[0]   # (tq, 512) compute dtype
    kv = kv_ref[0]      # (L, 1024) compute dtype

    for h in range(num_heads):  # statically unrolled; static lane slices
        q_h = q_rows[:, h * d_k:(h + 1) * d_k]                      # (tq, d_k)
        k_h = kv[:, h * d_k:(h + 1) * d_k]                          # (L, d_k)
        v_h = kv[:, d_model + h * d_k: d_model + (h + 1) * d_k]     # (L, d_k)

        # q @ k^T without a materialized transpose: contract the last dims.
        s = jax.lax.dot_general(
            q_h, k_h,
            dimension_numbers=(((1,), (1,)), ((), ())),
            preferred_element_type=jnp.float32,
        )  # (tq, L) f32

        # Numerically stable softmax in f32; normalizer via EUP reciprocal.
        m = jnp.max(s, axis=-1, keepdims=True)
        p = jnp.exp(s - m)
        denom = jnp.sum(p, axis=-1, keepdims=True)
        p = p * pl.reciprocal(denom, approx=True)

        # TODO(synk): train-mode dropout on p not implemented (eval = identity).
        out_h = jnp.dot(p.astype(kv.dtype), v_h,
                        preferred_element_type=jnp.float32)          # (tq, d_k) f32
        cat_ref[:, h * d_k:(h + 1) * d_k] = out_h.astype(cat_ref.dtype)

    # Fused output projection W_0 (accumulate in f32, add bias, store f32).
    y = jnp.dot(cat_ref[...], w0_ref[...], preferred_element_type=jnp.float32)
    o_ref[0] = (y + b0_ref[...]).astype(o_ref.dtype)


def pallas_attention_w0(q_proj, kv_proj, w0_t, b0, *, tq_max=256):
    """q_proj: (B,L,512); kv_proj: (B,L,1024); w0_t: (512,512); b0: (1,512) f32."""
    B, L, _ = q_proj.shape
    cd = q_proj.dtype
    tq = L if L <= tq_max else tq_max
    # TODO(synk): ragged q-tiling (L not a multiple of tq) not handled.
    assert L % tq == 0, "sequence length must be a multiple of the q tile"
    n_qt = L // tq

    return pl.pallas_call(
        attention_w0_kernel,
        out_shape=jax.ShapeDtypeStruct((B, L, d_model), jnp.float32),
        grid_spec=pltpu.PrefetchScalarGridSpec(
            num_scalar_prefetch=0,
            grid=(B, n_qt),
            in_specs=[
                pl.BlockSpec((1, tq, d_model), lambda b, i: (b, i, 0)),
                pl.BlockSpec((1, L, 2 * d_model), lambda b, i: (b, 0, 0)),
                pl.BlockSpec((d_model, d_model), lambda b, i: (0, 0)),
                pl.BlockSpec((1, d_model), lambda b, i: (0, 0)),
            ],
            out_specs=pl.BlockSpec((1, tq, d_model), lambda b, i: (b, i, 0)),
            scratch_shapes=[pltpu.VMEM((tq, d_model), cd)],
        ),
        compiler_params=_mosaic_params("parallel", "parallel"),
    )(q_proj, kv_proj, w0_t, b0)


# ---------------------------------------------------------------------------
# Full MultiheadAttention forward.
# ---------------------------------------------------------------------------
def multihead_attention_forward(params, q, k, v, mask=None, *,
                                compute_dtype=jnp.bfloat16):
    """q, k, v: (B, L, d_model) f32. Returns (B, L, d_model) f32 (eval mode)."""
    # TODO(synk): mask path (masked_fill with -1e9 before softmax) not implemented.
    assert mask is None, "mask path not implemented"
    B, L, _ = q.shape
    M = B * L
    cd = compute_dtype
    scale = 1.0 / math.sqrt(d_k)

    # 1/sqrt(d_k) folded into w_q AND b_q (free: these arrays are materialized
    # here anyway), so the attention kernel never multiplies by the scale.
    wq_t = (params["w_q"].T * scale).astype(cd)
    wk_t = params["w_k"].T.astype(cd)
    wv_t = params["w_v"].T.astype(cd)
    bq = (params["b_q"] * scale).reshape(1, d_model).astype(jnp.float32)
    bkv = (
        jnp.concatenate([params["b_k"], params["b_v"]])
        .reshape(1, 2 * d_model)
        .astype(jnp.float32)
    )

    if (q is k) and (k is v):
        # Self-attention fast path: read x once, one wide matmul.
        x2d = q.reshape(M, d_model).astype(cd)
        w_qkv = jnp.concatenate([wq_t, wk_t, wv_t], axis=1)   # (512, 1536)
        b_qkv = jnp.concatenate([bq, bkv], axis=1)             # (1, 1536)
        q_proj, kv_proj = pallas_qkv_proj_self(x2d, w_qkv, b_qkv)
    else:
        q2d = q.reshape(M, d_model).astype(cd)
        k2d = k.reshape(M, d_model).astype(cd)
        v2d = v.reshape(M, d_model).astype(cd)
        q_proj, kv_proj = pallas_qkv_proj(
            q2d, k2d, v2d, wq_t, wk_t, wv_t, bq, bkv
        )

    q_proj = q_proj.reshape(B, L, d_model)          # free views
    kv_proj = kv_proj.reshape(B, L, 2 * d_model)

    # Attention for all heads + fused W_0 projection; output already f32.
    return pallas_attention_w0(
        q_proj, kv_proj,
        params["w_0"].T.astype(cd),
        params["b_0"].reshape(1, d_model).astype(jnp.float32),
    )


# ---------------------------------------------------------------------------
# Pure-JAX reference for the correctness check.
# ---------------------------------------------------------------------------
def reference_forward(params, q, k, v):
    B, L, _ = q.shape

    def proj(x, w, b):
        y = x @ w.T + b
        return y.reshape(B, L, num_heads, d_k).transpose(0, 2, 1, 3)

    qh = proj(q, params["w_q"], params["b_q"])
    kh = proj(k, params["w_k"], params["b_k"])
    vh = proj(v, params["w_v"], params["b_v"])
    scores = jnp.einsum("bhqd,bhkd->bhqk", qh, kh) / math.sqrt(d_k)
    p = jax.nn.softmax(scores, axis=-1)
    attn = jnp.einsum("bhqk,bhkd->bhqd", p, vh)
    concat = attn.transpose(0, 2, 1, 3).reshape(B, L, d_model)
    return concat @ params["w_0"].T + params["b_0"]


def init_params(key):
    """Deterministic init matching nn.Linear default: U(-1/sqrt(fan_in), 1/sqrt(fan_in))."""
    bound = 1.0 / math.sqrt(d_model)
    names = ["w_q", "b_q", "w_k", "b_k", "w_v", "b_v", "w_0", "b_0"]
    keys = jax.random.split(key, len(names))
    params = {}
    for name, kk in zip(names, keys):
        shape = (d_model, d_model) if name.startswith("w") else (d_model,)
        params[name] = jax.random.uniform(
            kk, shape, dtype=jnp.float32, minval=-bound, maxval=bound
        )
    return params


if __name__ == "__main__":
    key = jax.random.PRNGKey(0)
    kp, kq, kk_, kv = jax.random.split(key, 4)

    params = init_params(kp)

    B, L = 2, 8
    q = jax.random.normal(kq, (B, L, d_model), dtype=jnp.float32)
    k = jax.random.normal(kk_, (B, L, d_model), dtype=jnp.float32)
    v = jax.random.normal(kv, (B, L, d_model), dtype=jnp.float32)

    ref = reference_forward(params, q, k, v)

    # f32 compute path (tolerance covers the approx EUP reciprocal in softmax).
    out_f32 = jax.block_until_ready(
        multihead_attention_forward(params, q, k, v, compute_dtype=jnp.float32)
    )
    assert out_f32.shape == (B, L, d_model)
    assert jnp.allclose(out_f32, ref, atol=2e-2, rtol=2e-2), (
        f"f32 max abs diff {jnp.max(jnp.abs(out_f32 - ref))}"
    )

    # Default bf16 MXU-input path (f32 accumulation / f32 softmax).
    out_bf16 = jax.block_until_ready(multihead_attention_forward(params, q, k, v))
    assert jnp.allclose(out_bf16, ref, atol=1e-1, rtol=1e-1), (
        f"bf16 max abs diff {jnp.max(jnp.abs(out_bf16 - ref))}"
    )

    # Self-attention fast path (q is k is v): stacked-weight single-matmul QKV.
    ref_self = reference_forward(params, q, q, q)
    out_self = jax.block_until_ready(multihead_attention_forward(params, q, q, q))
    assert jnp.allclose(out_self, ref_self, atol=1e-1, rtol=1e-1), (
        f"self-attn max abs diff {jnp.max(jnp.abs(out_self - ref_self))}"
    )

    print("KERNEL_OK")
</pallas_src>

<mosaic_0001>
module attributes {stable_mosaic.version = 11 : i64} {
  func.func @qkv_proj_kernel(%arg0: i32, %arg1: memref<16x512xf32, #tpu.memory_space<vmem>>, %arg2: memref<16x512xf32, #tpu.memory_space<vmem>>, %arg3: memref<16x512xf32, #tpu.memory_space<vmem>>, %arg4: memref<512x512xf32, #tpu.memory_space<vmem>>, %arg5: memref<512x512xf32, #tpu.memory_space<vmem>>, %arg6: memref<512x512xf32, #tpu.memory_space<vmem>>, %arg7: memref<1x512xf32, #tpu.memory_space<vmem>>, %arg8: memref<1x1024xf32, #tpu.memory_space<vmem>>, %arg9: memref<16x512xf32, #tpu.memory_space<vmem>>, %arg10: memref<16x1024xf32, #tpu.memory_space<vmem>>) attributes {dimension_semantics = [#tpu.dimension_semantics<parallel>], iteration_bounds = array<i64: 1>, scalar_prefetch = 0 : i64, scratch_operands = 0 : i64, tpu.core_type = #tpu.core_type<tc>, window_params = [{transform_indices = @transform_0, window_bounds = array<i64: 16, 512>}, {transform_indices = @transform_1, window_bounds = array<i64: 16, 512>}, {transform_indices = @transform_2, window_bounds = array<i64: 16, 512>}, {pipeline_mode = #tpu.pipeline_mode<synchronous>, transform_indices = @transform_3, window_bounds = array<i64: 512, 512>}, {pipeline_mode = #tpu.pipeline_mode<synchronous>, transform_indices = @transform_4, window_bounds = array<i64: 512, 512>}, {pipeline_mode = #tpu.pipeline_mode<synchronous>, transform_indices = @transform_5, window_bounds = array<i64: 512, 512>}, {pipeline_mode = #tpu.pipeline_mode<synchronous>, transform_indices = @transform_6, window_bounds = array<i64: 1, 512>}, {pipeline_mode = #tpu.pipeline_mode<synchronous>, transform_indices = @transform_7, window_bounds = array<i64: 1, 1024>}, {transform_indices = @transform_8, window_bounds = array<i64: 16, 512>}, {transform_indices = @transform_9, window_bounds = array<i64: 16, 1024>}]} {
    %c0 = arith.constant 0 : index
    %c0_0 = arith.constant 0 : index
    %0 = vector.load %arg1[%c0, %c0_0] : memref<16x512xf32, #tpu.memory_space<vmem>>, vector<16x512xf32>
    %c0_1 = arith.constant 0 : index
    %c0_2 = arith.constant 0 : index
    %1 = vector.load %arg4[%c0_1, %c0_2] : memref<512x512xf32, #tpu.memory_space<vmem>>, vector<512x512xf32>
    %cst = arith.constant dense<0.000000e+00> : vector<16x512xf32>
    %2 = tpu.matmul %0, %1, %cst {dimension_numbers = #tpu.dot_dimension_numbers<[1], [0], [0], [1], [0, 0, 1, 1], [], []>} : vector<16x512xf32>, vector<512x512xf32>, vector<16x512xf32> -> vector<16x512xf32>
    %c0_3 = arith.constant 0 : index
    %c0_4 = arith.constant 0 : index
    %3 = vector.load %arg7[%c0_3, %c0_4] : memref<1x512xf32, #tpu.memory_space<vmem>>, vector<1x512xf32>
    %4 = vector.broadcast %3 : vector<1x512xf32> to vector<16x512xf32>
    %5 = arith.addf %2, %4 : vector<16x512xf32>
    %c0_5 = arith.constant 0 : index
    %c0_6 = arith.constant 0 : index
    %6 = vector.load %arg9[%c0_5, %c0_6] : memref<16x512xf32, #tpu.memory_space<vmem>>, vector<16x512xf32>
    tpu.vector_store %arg9[%c0_5, %c0_6], %5 {strides = array<i32>} : memref<16x512xf32, #tpu.memory_space<vmem>>, vector<16x512xf32>,
    %c0_7 = arith.constant 0 : index
    %c0_8 = arith.constant 0 : index
    %7 = vector.load %arg2[%c0_7, %c0_8] : memref<16x512xf32, #tpu.memory_space<vmem>>, vector<16x512xf32>
    %c0_9 = arith.constant 0 : index
    %c0_10 = arith.constant 0 : index
    %8 = vector.load %arg5[%c0_9, %c0_10] : memref<512x512xf32, #tpu.memory_space<vmem>>, vector<512x512xf32>
    %cst_11 = arith.constant dense<0.000000e+00> : vector<16x512xf32>
    %9 = tpu.matmul %7, %8, %cst_11 {dimension_numbers = #tpu.dot_dimension_numbers<[1], [0], [0], [1], [0, 0, 1, 1], [], []>} : vector<16x512xf32>, vector<512x512xf32>, vector<16x512xf32> -> vector<16x512xf32>
    %c0_12 = arith.constant 0 : index
    %c0_13 = arith.constant 0 : index
    %10 = vector.load %arg8[%c0_12, %c0_13] : memref<1x1024xf32, #tpu.memory_space<vmem>>, vector<1x512xf32>
    %11 = vector.broadcast %10 : vector<1x512xf32> to vector<16x512xf32>
    %12 = arith.addf %9, %11 : vector<16x512xf32>
    %c0_14 = arith.constant 0 : index
    %c0_15 = arith.constant 0 : index
    %13 = vector.load %arg10[%c0_14, %c0_15] : memref<16x1024xf32, #tpu.memory_space<vmem>>, vector<16x512xf32>
    tpu.vector_store %arg10[%c0_14, %c0_15], %12 {strides = array<i32>} : memref<16x1024xf32, #tpu.memory_space<vmem>>, vector<16x512xf32>,
    %c0_16 = arith.constant 0 : index
    %c0_17 = arith.constant 0 : index
    %14 = vector.load %arg3[%c0_16, %c0_17] : memref<16x512xf32, #tpu.memory_space<vmem>>, vector<16x512xf32>
    %c0_18 = arith.constant 0 : index
    %c0_19 = arith.constant 0 : index
    %15 = vector.load %arg6[%c0_18, %c0_19] : memref<512x512xf32, #tpu.memory_space<vmem>>, vector<512x512xf32>
    %cst_20 = arith.constant dense<0.000000e+00> : vector<16x512xf32>
    %16 = tpu.matmul %14, %15, %cst_20 {dimension_numbers = #tpu.dot_dimension_numbers<[1], [0], [0], [1], [0, 0, 1, 1], [], []>} : vector<16x512xf32>, vector<512x512xf32>, vector<16x512xf32> -> vector<16x512xf32>
    %c0_21 = arith.constant 0 : index
    %c512 = arith.constant 512 : index
    %17 = vector.load %arg8[%c0_21, %c512] : memref<1x1024xf32, #tpu.memory_space<vmem>>, vector<1x512xf32>
    %18 = vector.broadcast %17 : vector<1x512xf32> to vector<16x512xf32>
    %19 = arith.addf %16, %18 : vector<16x512xf32>
    %c0_22 = arith.constant 0 : index
    %c512_23 = arith.constant 512 : index
    %20 = vector.load %arg10[%c0_22, %c512_23] : memref<16x1024xf32, #tpu.memory_space<vmem>>, vector<16x512xf32>
    tpu.vector_store %arg10[%c0_22, %c512_23], %19 {strides = array<i32>} : memref<16x1024xf32, #tpu.memory_space<vmem>>, vector<16x512xf32>,
    return
  }
  func.func @transform_0(%arg0: i32) -> (i32, i32) {
    %c0_i32 = arith.constant 0 : i32
    %c0_i32_0 = arith.constant 0 : i32
    return %arg0, %c0_i32 : i32, i32
  }
  func.func @transform_1(%arg0: i32) -> (i32, i32) {
    %c0_i32 = arith.constant 0 : i32
    %c0_i32_0 = arith.constant 0 : i32
    return %arg0, %c0_i32 : i32, i32
  }
  func.func @transform_2(%arg0: i32) -> (i32, i32) {
    %c0_i32 = arith.constant 0 : i32
    %c0_i32_0 = arith.constant 0 : i32
    return %arg0, %c0_i32 : i32, i32
  }
  func.func @transform_3(%arg0: i32) -> (i32, i32) {
    %c0_i32 = arith.constant 0 : i32
    %c0_i32_0 = arith.constant 0 : i32
    %c0_i32_1 = arith.constant 0 : i32
    return %c0_i32, %c0_i32_0 : i32, i32
  }
  func.func @transform_4(%arg0: i32) -> (i32, i32) {
    %c0_i32 = arith.constant 0 : i32
    %c0_i32_0 = arith.constant 0 : i32
    %c0_i32_1 = arith.constant 0 : i32
    return %c0_i32, %c0_i32_0 : i32, i32
  }
  func.func @transform_5(%arg0: i32) -> (i32, i32) {
    %c0_i32 = arith.constant 0 : i32
    %c0_i32_0 = arith.constant 0 : i32
    %c0_i32_1 = arith.constant 0 : i32
    return %c0_i32, %c0_i32_0 : i32, i32
  }
  func.func @transform_6(%arg0: i32) -> (i32, i32) {
    %c0_i32 = arith.constant 0 : i32
    %c0_i32_0 = arith.constant 0 : i32
    %c0_i32_1 = arith.constant 0 : i32
    return %c0_i32, %c0_i32_0 : i32, i32
  }
  func.func @transform_7(%arg0: i32) -> (i32, i32) {
    %c0_i32 = arith.constant 0 : i32
    %c0_i32_0 = arith.constant 0 : i32
    %c0_i32_1 = arith.constant 0 : i32
    return %c0_i32, %c0_i32_0 : i32, i32
  }
  func.func @transform_8(%arg0: i32) -> (i32, i32) {
    %c0_i32 = arith.constant 0 : i32
    %c0_i32_0 = arith.constant 0 : i32
    return %arg0, %c0_i32 : i32, i32
  }
  func.func @transform_9(%arg0: i32) -> (i32, i32) {
    %c0_i32 = arith.constant 0 : i32
    %c0_i32_0 = arith.constant 0 : i32
    return %arg0, %c0_i32 : i32, i32
  }
}

</mosaic_0001>

<llo_original>
// kernel: tpu_custom_call.1
$region0: #{tpu_custom_call.1}
  #allocation0 [shape = 'u32[]', space=smem, size = 0x4, offset = 0x4, fixed_abs, tag = 'smem constant byte address 0x4 - core index']
  #allocation1 [shape = 'u32[144,128]{1,0:T(1,128)}', space=vmem, size = 0x12000, scoped, tag = 'internal scratch']
  %s0 = inlined_call_operand.hbm [shape: f32[16,512], index: 0, kind: input, shape index: {}]
  %s1 = inlined_call_operand.hbm [shape: f32[16,512], index: 1, kind: input, shape index: {}]
  %s2 = inlined_call_operand.hbm [shape: f32[16,512], index: 2, kind: input, shape index: {}]
  %s3 = inlined_call_operand.hbm [shape: f32[512,512], index: 3, kind: input, shape index: {}]
  %s4 = inlined_call_operand.hbm [shape: f32[512,512], index: 4, kind: input, shape index: {}]
  %s5 = inlined_call_operand.hbm [shape: f32[512,512], index: 5, kind: input, shape index: {}]
  %s6 = inlined_call_operand.vmem [shape: f32[1,512], index: 6, kind: input, shape index: {}]
  %s7 = inlined_call_operand.vmem [shape: f32[1,1024], index: 7, kind: input, shape index: {}]
  %s8 = inlined_call_operand.hbm [shape: f32[16,512], index: 8, kind: output, shape index: {0}]
  %s9 = inlined_call_operand.hbm [shape: f32[16,1024], index: 9, kind: output, shape index: {1}]
  %10 = xla_tuple %s8, %s9
  %s11 = sld [smem:[#allocation0]]
  $region74: #{tpu_custom_call.1} parent=0
    _
  %s13 = ssub.s32 1, %s11
  %s14 = scalar_select 0, %s13, %s11
  $region1: #{tpu_custom_call.1} parent=0
    #allocation2 [shape = 'u8[32768]{0}', space=vmem, size = 0x8000, scoped, tag = 'input window, operand 0, single buffered']
    #allocation3 [shape = 's32[1]{0}', space=sflag, size = 0x4, scoped, tag = 'scoped memory for tpu_custom_call.1']
    #allocation4 [shape = 's32[1]{0}', space=sflag, size = 0x4, scoped, tag = 'scoped memory for tpu_custom_call.1']
    #allocation5 [shape = 'u8[32768]{0}', space=vmem, size = 0x8000, scoped, tag = 'input window, operand 1, single buffered']
    #allocation6 [shape = 's32[1]{0}', space=sflag, size = 0x4, scoped, tag = 'scoped memory for tpu_custom_call.1']
    #allocation7 [shape = 'u8[32768]{0}', space=vmem, size = 0x8000, scoped, tag = 'input window, operand 2, single buffered']
    #allocation8 [shape = 'u8[1048576]{0}', space=vmem, size = 0x100000, scoped, tag = 'input window, operand 3, single buffered']
    #allocation9 [shape = 's32[1]{0}', space=sflag, size = 0x4, scoped, tag = 'scoped memory for tpu_custom_call.1']
    #allocation10 [shape = 'u8[1048576]{0}', space=vmem, size = 0x100000, scoped, tag = 'input window, operand 4, single buffered']
    #allocation11 [shape = 'u8[1048576]{0}', space=vmem, size = 0x100000, scoped, tag = 'input window, operand 5, single buffered']
    #allocation12 [shape = 's32[1]{0}', space=sflag, size = 0x4, scoped, tag = 'scoped memory for tpu_custom_call.1']
    #allocation13 [shape = 'u8[32768]{0}', space=vmem, size = 0x8000, scoped, tag = 'output window, operand 0, single buffered']
    #allocation14 [shape = 'u8[65536]{0}', space=vmem, size = 0x10000, scoped, tag = 'output window, operand 1, single buffered']
    #allocation15 [shape = 's32[1]{0}', space=sflag, size = 0x4, scoped, tag = 'scoped memory for tpu_custom_call.1']
    %15 = vsyncpa [#allocation3], 0
    %16 = vsyncpa [#allocation6], 0
    %17 = vsyncpa [#allocation9], 0
    %18 = vsyncpa [#allocation12], 0
    %19 = vsyncpa [#allocation4], 0
    %20 = vsyncpa [#allocation15], 0
    // Predicated region
    $region2: #{tpu_custom_call.1} parent=1 // pred_check
      _
    $region3: #{tpu_custom_call.1} parent=1 // pred_check_branch
      %22 = sbr.rel (0) target = $region5
    $region4: #{tpu_custom_call.1} parent=1 // pred_region
      %s24 = ssub.s32 1024, 1024
      %25 = vsyncadd [#allocation3], %s24
      %s26 = sshll.u32 [#allocation2], 4
      %s27 = int_to_ptr.vmem [resolvable:$true] %s26
      %32 = dma.hbm_to_vmem [thread:$0]  %s0, 1024, %s27, [#allocation3], 512, 512, 32
    $region5: #{tpu_custom_call.1} parent=1 // pred_fallthru
      _
    // Predicated region
    $region6: #{tpu_custom_call.1} parent=1 // pred_check
      _
    $region7: #{tpu_custom_call.1} parent=1 // pred_check_branch
      %34 = sbr.rel (0) target = $region9
    $region8: #{tpu_custom_call.1} parent=1 // pred_region
      %s36 = ssub.s32 1024, 1024
      %37 = vsyncadd [#allocation6], %s36
      %s38 = sshll.u32 [#allocation5], 4
      %s39 = int_to_ptr.vmem [resolvable:$true] %s38
      %44 = dma.hbm_to_vmem [thread:$0]  %s1, 1024, %s39, [#allocation6], 512, 512, 32
    $region9: #{tpu_custom_call.1} parent=1 // pred_fallthru
      _
    // Predicated region
    $region10: #{tpu_custom_call.1} parent=1 // pred_check
      _
    $region11: #{tpu_custom_call.1} parent=1 // pred_check_branch
      %46 = sbr.rel (0) target = $region13
    $region12: #{tpu_custom_call.1} parent=1 // pred_region
      %s48 = ssub.s32 1024, 1024
      %49 = vsyncadd [#allocation6], %s48
      %s50 = sshll.u32 [#allocation7], 4
      %s51 = int_to_ptr.vmem [resolvable:$true] %s50
      %56 = dma.hbm_to_vmem [thread:$0]  %s2, 1024, %s51, [#allocation6], 512, 512, 32
    $region13: #{tpu_custom_call.1} parent=1 // pred_fallthru
      _
    // Predicated region
    $region14: #{tpu_custom_call.1} parent=1 // pred_check
      _
    $region15: #{tpu_custom_call.1} parent=1 // pred_check_branch
      %58 = sbr.rel (0) target = $region17
    $region16: #{tpu_custom_call.1} parent=1 // pred_region
      %s60 = ssub.s32 32768, 32768
      %61 = vsyncadd [#allocation9], %s60
      %s62 = sshll.u32 [#allocation8], 4
      %s63 = int_to_ptr.vmem [resolvable:$true] %s62
      %68 = dma.hbm_to_vmem [thread:$0]  %s3, 32768, %s63, [#allocation9], 512, 512, 32
    $region17: #{tpu_custom_call.1} parent=1 // pred_fallthru
      _
    // Predicated region
    $region18: #{tpu_custom_call.1} parent=1 // pred_check
      _
    $region19: #{tpu_custom_call.1} parent=1 // pred_check_branch
      %70 = sbr.rel (0) target = $region21
    $region20: #{tpu_custom_call.1} parent=1 // pred_region
      %s72 = ssub.s32 32768, 32768
      %73 = vsyncadd [#allocation9], %s72
      %s74 = sshll.u32 [#allocation10], 4
      %s75 = int_to_ptr.vmem [resolvable:$true] %s74
      %80 = dma.hbm_to_vmem [thread:$0]  %s4, 32768, %s75, [#allocation9], 512, 512, 32
    $region21: #{tpu_custom_call.1} parent=1 // pred_fallthru
      _
    // Predicated region
    $region22: #{tpu_custom_call.1} parent=1 // pred_check
      _
    $region23: #{tpu_custom_call.1} parent=1 // pred_check_branch
      %82 = sbr.rel (0) target = $region25
    $region24: #{tpu_custom_call.1} parent=1 // pred_region
      %s84 = ssub.s32 32768, 32768
      %85 = vsyncadd [#allocation12], %s84
      %s86 = sshll.u32 [#allocation11], 4
      %s87 = int_to_ptr.vmem [resolvable:$true] %s86
      %92 = dma.hbm_to_vmem [thread:$0]  %s5, 32768, %s87, [#allocation12], 512, 512, 32
    $region25: #{tpu_custom_call.1} parent=1 // pred_fallthru
      _
    // Predicated region
    $region26: #{tpu_custom_call.1} parent=1 // pred_check
      _
    $region27: #{tpu_custom_call.1} parent=1 // pred_check_branch
      %94 = sbr.rel (0) target = $region29
    $region28: #{tpu_custom_call.1} parent=1 // pred_region
      _
    $region29: #{tpu_custom_call.1} parent=1 // pred_fallthru
      _
    // Predicated region
    $region30: #{tpu_custom_call.1} parent=1 // pred_check
      _
    $region31: #{tpu_custom_call.1} parent=1 // pred_check_branch
      %96 = sbr.rel (0) target = $region33
    $region32: #{tpu_custom_call.1} parent=1 // pred_region
      _
    $region33: #{tpu_custom_call.1} parent=1 // pred_fallthru
      _
    // Predicated region
    $region34: #{tpu_custom_call.1} parent=1 // pred_check
      _
    $region35: #{tpu_custom_call.1} parent=1 // pred_check_branch
      %98 = sbr.rel (0) target = $region37
    $region36: #{tpu_custom_call.1} parent=1 // pred_region
      %99 = dma.done [#allocation3], 1024
    $region37: #{tpu_custom_call.1} parent=1 // pred_fallthru
      _
    // Predicated region
    $region38: #{tpu_custom_call.1} parent=1 // pred_check
      _
    $region39: #{tpu_custom_call.1} parent=1 // pred_check_branch
      %101 = sbr.rel (0) target = $region41
    $region40: #{tpu_custom_call.1} parent=1 // pred_region
      %102 = dma.done [#allocation6], 1024
    $region41: #{tpu_custom_call.1} parent=1 // pred_fallthru
      _
    // Predicated region
    $region42: #{tpu_custom_call.1} parent=1 // pred_check
      _
    $region43: #{tpu_custom_call.1} parent=1 // pred_check_branch
      %104 = sbr.rel (0) target = $region45
    $region44: #{tpu_custom_call.1} parent=1 // pred_region
      %105 = dma.done [#allocation6], 1024
    $region45: #{tpu_custom_call.1} parent=1 // pred_fallthru
      _
    // Predicated region
    $region46: #{tpu_custom_call.1} parent=1 // pred_check
      _
    $region47: #{tpu_custom_call.1} parent=1 // pred_check_branch
      %107 = sbr.rel (0) target = $region49
    $region48: #{tpu_custom_call.1} parent=1 // pred_region
      %108 = dma.done [#allocation9], 32768
    $region49: #{tpu_custom_call.1} parent=1 // pred_fallthru
      _
    // Predicated region
    $region50: #{tpu_custom_call.1} parent=1 // pred_check
      _
    $region51: #{tpu_custom_call.1} parent=1 // pred_check_branch
      %110 = sbr.rel (0) target = $region53
    $region52: #{tpu_custom_call.1} parent=1 // pred_region
      %111 = dma.done [#allocation9], 32768
    $region53: #{tpu_custom_call.1} parent=1 // pred_fallthru
      _
    // Predicated region
    $region54: #{tpu_custom_call.1} parent=1 // pred_check
      _
    $region55: #{tpu_custom_call.1} parent=1 // pred_check_branch
      %113 = sbr.rel (0) target = $region57
    $region56: #{tpu_custom_call.1} parent=1 // pred_region
      %114 = dma.done [#allocation12], 32768
    $region57: #{tpu_custom_call.1} parent=1 // pred_fallthru
      _
    %v115 = vld [vmem:[#allocation2] sm:$0xff]
    %v116 = vld [vmem:[#allocation2 + $0x8] sm:$0xff]
    %v117 = vld [vmem:[#allocation2 + $0x10] sm:$0xff]
    %v118 = vld [vmem:[#allocation2 + $0x18] sm:$0xff]
    %v119 = vld [vmem:[#allocation2 + $0x20] sm:$0xff]
    %v120 = vld [vmem:[#allocation2 + $0x28] sm:$0xff]
    %v121 = vld [vmem:[#allocation2 + $0x30] sm:$0xff]
    %v122 = vld [vmem:[#allocation2 + $0x38] sm:$0xff]
    %v123 = vld [vmem:[#allocation8] sm:$0xff]
    %v124 = vld [vmem:[#allocation8 + $0x8] sm:$0xff]
    %v125 = vld [vmem:[#allocation8 + $0x10] sm:$0xff]
    %v126 = vld [vmem:[#allocation8 + $0x18] sm:$0xff]
    %v127 = vld [vmem:[#allocation8 + $0x20] sm:$0xff]
    %v128 = vld [vmem:[#allocation8 + $0x28] sm:$0xff]
    %v129 = vld [vmem:[#allocation8 + $0x30] sm:$0xff]
    %v130 = vld [vmem:[#allocation8 + $0x38] sm:$0xff]
    %v131 = vld [vmem:[#allocation8 + $0x40] sm:$0xff]
    %v132 = vld [vmem:[#allocation8 + $0x48] sm:$0xff]
    %v133 = vld [vmem:[#allocation8 + $0x50] sm:$0xff]
    %v134 = vld [vmem:[#allocation8 + $0x58] sm:$0xff]
    %v135 = vld [vmem:[#allocation8 + $0x60] sm:$0xff]
    %v136 = vld [vmem:[#allocation8 + $0x68] sm:$0xff]
    %v137 = vld [vmem:[#allocation8 + $0x70] sm:$0xff]
    %v138 = vld [vmem:[#allocation8 + $0x78] sm:$0xff]
    %v139 = vld [vmem:[#allocation8 + $0x80] sm:$0xff]
    %v140 = vld [vmem:[#allocation8 + $0x88] sm:$0xff]
    %v141 = vld [vmem:[#allocation8 + $0x90] sm:$0xff]
    %v142 = vld [vmem:[#allocation8 + $0x98] sm:$0xff]
    %v143 = vld [vmem:[#allocation8 + $0xa0] sm:$0xff]
    %v144 = vld [vmem:[#allocation8 + $0xa8] sm:$0xff]
    %v145 = vld [vmem:[#allocation8 + $0xb0] sm:$0xff]
    %v146 = vld [vmem:[#allocation8 + $0xb8] sm:$0xff]
    %v147 = vld [vmem:[#allocation8 + $0xc0] sm:$0xff]
    %v148 = vld [vmem:[#allocation8 + $0xc8] sm:$0xff]
    %v149 = vld [vmem:[#allocation8 + $0xd0] sm:$0xff]
    %v150 = vld [vmem:[#allocation8 + $0xd8] sm:$0xff]
    %v151 = vld [vmem:[#allocation8 + $0xe0] sm:$0xff]
    %v152 = vld [vmem:[#allocation8 + $0xe8] sm:$0xff]
    %v153 = vld [vmem:[#allocation8 + $0xf0] sm:$0xff]
    %v154 = vld [vmem:[#allocation8 + $0xf8] sm:$0xff]
    %v155 = vld [vmem:[#allocation8 + $0x100] sm:$0xff]
    %v156 = vld [vmem:[#allocation8 + $0x108] sm:$0xff]
    %v157 = vld [vmem:[#allocation8 + $0x110] sm:$0xff]
    %v158 = vld [vmem:[#allocation8 + $0x118] sm:$0xff]
    %v159 = vld [vmem:[#allocation8 + $0x120] sm:$0xff]
    %v160 = vld [vmem:[#allocation8 + $0x128] sm:$0xff]
    %v161 = vld [vmem:[#allocation8 + $0x130] sm:$0xff]
    %v162 = vld [vmem:[#allocation8 + $0x138] sm:$0xff]
    %v163 = vld [vmem:[#allocation8 + $0x140] sm:$0xff]
    %v164 = vld [vmem:[#allocation8 + $0x148] sm:$0xff]
    %v165 = vld [vmem:[#allocation8 + $0x150] sm:$0xff]
    %v166 = vld [vmem:[#allocation8 + $0x158] sm:$0xff]
    %v167 = vld [vmem:[#allocation8 + $0x160] sm:$0xff]
    %v168 = vld [vmem:[#allocation8 + $0x168] sm:$0xff]
    %v169 = vld [vmem:[#allocation8 + $0x170] sm:$0xff]
    %v170 = vld [vmem:[#allocation8 + $0x178] sm:$0xff]
    %v171 = vld [vmem:[#allocation8 + $0x180] sm:$0xff]
    %v172 = vld [vmem:[#allocation8 + $0x188] sm:$0xff]
    %v173 = vld [vmem:[#allocation8 + $0x190] sm:$0xff]
    %v174 = vld [vmem:[#allocation8 + $0x198] sm:$0xff]
    %v175 = vld [vmem:[#allocation8 + $0x1a0] sm:$0xff]
    %v176 = vld [vmem:[#allocation8 + $0x1a8] sm:$0xff]
    %v177 = vld [vmem:[#allocation8 + $0x1b0] sm:$0xff]
    %v178 = vld [vmem:[#allocation8 + $0x1b8] sm:$0xff]
    %v179 = vld [vmem:[#allocation8 + $0x1c0] sm:$0xff]
    %v180 = vld [vmem:[#allocation8 + $0x1c8] sm:$0xff]
    %v181 = vld [vmem:[#allocation8 + $0x1d0] sm:$0xff]
    %v182 = vld [vmem:[#allocation8 + $0x1d8] sm:$0xff]
    %v183 = vld [vmem:[#allocation8 + $0x1e0] sm:$0xff]
    %v184 = vld [vmem:[#allocation8 + $0x1e8] sm:$0xff]
    %v185 = vld [vmem:[#allocation8 + $0x1f0] sm:$0xff]
    %v186 = vld [vmem:[#allocation8 + $0x1f8] sm:$0xff]
    %v187 = vld [vmem:[#allocation8 + $0x200] sm:$0xff]
    %v188 = vld [vmem:[#allocation8 + $0x208] sm:$0xff]
    %v189 = vld [vmem:[#allocation8 + $0x210] sm:$0xff]
    %v190 = vld [vmem:[#allocation8 + $0x218] sm:$0xff]
    %v191 = vld [vmem:[#allocation8 + $0x220] sm:$0xff]
    %v192 = vld [vmem:[#allocation8 + $0x228] sm:$0xff]
    %v193 = vld [vmem:[#allocation8 + $0x230] sm:$0xff]
    %v194 = vld [vmem:[#allocation8 + $0x238] sm:$0xff]
    %v195 = vld [vmem:[#allocation8 + $0x240] sm:$0xff]
    %v196 = vld [vmem:[#allocation8 + $0x248] sm:$0xff]
    %v197 = vld [vmem:[#allocation8 + $0x250] sm:$0xff]
    %v198 = vld [vmem:[#allocation8 + $0x258] sm:$0xff]
    %v199 = vld [vmem:[#allocation8 + $0x260] sm:$0xff]
    %v200 = vld [vmem:[#allocation8 + $0x268] sm:$0xff]
    %v201 = vld [vmem:[#allocation8 + $0x270] sm:$0xff]
    %v202 = vld [vmem:[#allocation8 + $0x278] sm:$0xff]
    %v203 = vld [vmem:[#allocation8 + $0x280] sm:$0xff]
    %v204 = vld [vmem:[#allocation8 + $0x288] sm:$0xff]
    %v205 = vld [vmem:[#allocation8 + $0x290] sm:$0xff]
    %v206 = vld [vmem:[#allocation8 + $0x298] sm:$0xff]
    %v207 = vld [vmem:[#allocation8 + $0x2a0] sm:$0xff]
    %v208 = vld [vmem:[#allocation8 + $0x2a8] sm:$0xff]
    %v209 = vld [vmem:[#allocation8 + $0x2b0] sm:$0xff]
    %v210 = vld [vmem:[#allocation8 + $0x2b8] sm:$0xff]
    %v211 = vld [vmem:[#allocation8 + $0x2c0] sm:$0xff]
    %v212 = vld [vmem:[#allocation8 + $0x2c8] sm:$0xff]
    %v213 = vld [vmem:[#allocation8 + $0x2d0] sm:$0xff]
    %v214 = vld [vmem:[#allocation8 + $0x2d8] sm:$0xff]
    %v215 = vld [vmem:[#allocation8 + $0x2e0] sm:$0xff]
    %v216 = vld [vmem:[#allocation8 + $0x2e8] sm:$0xff]
    %v217 = vld [vmem:[#allocation8 + $0x2f0] sm:$0xff]
    %v218 = vld [vmem:[#allocation8 + $0x2f8] sm:$0xff]
    %v219 = vld [vmem:[#allocation8 + $0x300] sm:$0xff]
    %v220 = vld [vmem:[#allocation8 + $0x308] sm:$0xff]
    %v221 = vld [vmem:[#allocation8 + $0x310] sm:$0xff]
    %v222 = vld [vmem:[#allocation8 + $0x318] sm:$0xff]
    %v223 = vld [vmem:[#allocation8 + $0x320] sm:$0xff]
    %v224 = vld [vmem:[#allocation8 + $0x328] sm:$0xff]
    %v225 = vld [vmem:[#allocation8 + $0x330] sm:$0xff]
    %v226 = vld [vmem:[#allocation8 + $0x338] sm:$0xff]
    %v227 = vld [vmem:[#allocation8 + $0x340] sm:$0xff]
    %v228 = vld [vmem:[#allocation8 + $0x348] sm:$0xff]
    %v229 = vld [vmem:[#allocation8 + $0x350] sm:$0xff]
    %v230 = vld [vmem:[#allocation8 + $0x358] sm:$0xff]
    %v231 = vld [vmem:[#allocation8 + $0x360] sm:$0xff]
    %v232 = vld [vmem:[#allocation8 + $0x368] sm:$0xff]
    %v233 = vld [vmem:[#allocation8 + $0x370] sm:$0xff]
    %v234 = vld [vmem:[#allocation8 + $0x378] sm:$0xff]
    %v235 = vld [vmem:[#allocation8 + $0x380] sm:$0xff]
    %v236 = vld [vmem:[#allocation8 + $0x388] sm:$0xff]
    %v237 = vld [vmem:[#allocation8 + $0x390] sm:$0xff]
    %v238 = vld [vmem:[#allocation8 + $0x398] sm:$0xff]
    %v239 = vld [vmem:[#allocation8 + $0x3a0] sm:$0xff]
    %v240 = vld [vmem:[#allocation8 + $0x3a8] sm:$0xff]
    %v241 = vld [vmem:[#allocation8 + $0x3b0] sm:$0xff]
    %v242 = vld [vmem:[#allocation8 + $0x3b8] sm:$0xff]
    %v243 = vld [vmem:[#allocation8 + $0x3c0] sm:$0xff]
    %v244 = vld [vmem:[#allocation8 + $0x3c8] sm:$0xff]
    %v245 = vld [vmem:[#allocation8 + $0x3d0] sm:$0xff]
    %v246 = vld [vmem:[#allocation8 + $0x3d8] sm:$0xff]
    %v247 = vld [vmem:[#allocation8 + $0x3e0] sm:$0xff]
    %v248 = vld [vmem:[#allocation8 + $0x3e8] sm:$0xff]
    %v249 = vld [vmem:[#allocation8 + $0x3f0] sm:$0xff]
    %v250 = vld [vmem:[#allocation8 + $0x3f8] sm:$0xff]
    %v251 = vld [vmem:[#allocation8 + $0x400] sm:$0xff]
    %v252 = vld [vmem:[#allocation8 + $0x408] sm:$0xff]
    %v253 = vld [vmem:[#allocation8 + $0x410] sm:$0xff]
    %v254 = vld [vmem:[#allocation8 + $0x418] sm:$0xff]
    %v255 = vld [vmem:[#allocation8 + $0x420] sm:$0xff]
    %v256 = vld [vmem:[#allocation8 + $0x428] sm:$0xff]
    %v257 = vld [vmem:[#allocation8 + $0x430] sm:$0xff]
    %v258 = vld [vmem:[#allocation8 + $0x438] sm:$0xff]
    %v259 = vld [vmem:[#allocation8 + $0x440] sm:$0xff]
    %v260 = vld [vmem:[#allocation8 + $0x448] sm:$0xff]
    %v261 = vld [vmem:[#allocation8 + $0x450] sm:$0xff]
    %v262 = vld [vmem:[#allocation8 + $0x458] sm:$0xff]
    %v263 = vld [vmem:[#allocation8 + $0x460] sm:$0xff]
    %v264 = vld [vmem:[#allocation8 + $0x468] sm:$0xff]
    %v265 = vld [vmem:[#allocation8 + $0x470] sm:$0xff]
    %v266 = vld [vmem:[#allocation8 + $0x478] sm:$0xff]
    %v267 = vld [vmem:[#allocation8 + $0x480] sm:$0xff]
    %v268 = vld [vmem:[#allocation8 + $0x488] sm:$0xff]
    %v269 = vld [vmem:[#allocation8 + $0x490] sm:$0xff]
    %v270 = vld [vmem:[#allocation8 + $0x498] sm:$0xff]
    %v271 = vld [vmem:[#allocation8 + $0x4a0] sm:$0xff]
    %v272 = vld [vmem:[#allocation8 + $0x4a8] sm:$0xff]
    %v273 = vld [vmem:[#allocation8 + $0x4b0] sm:$0xff]
    %v274 = vld [vmem:[#allocation8 + $0x4b8] sm:$0xff]
    %v275 = vld [vmem:[#allocation8 + $0x4c0] sm:$0xff]
    %v276 = vld [vmem:[#allocation8 + $0x4c8] sm:$0xff]
    %v277 = vld [vmem:[#allocation8 + $0x4d0] sm:$0xff]
    %v278 = vld [vmem:[#allocation8 + $0x4d8] sm:$0xff]
    %v279 = vld [vmem:[#allocation8 + $0x4e0] sm:$0xff]
    %v280 = vld [vmem:[#allocation8 + $0x4e8] sm:$0xff]
    %v281 = vld [vmem:[#allocation8 + $0x4f0] sm:$0xff]
    %v282 = vld [vmem:[#allocation8 + $0x4f8] sm:$0xff]
    %v283 = vld [vmem:[#allocation8 + $0x500] sm:$0xff]
    %v284 = vld [vmem:[#allocation8 + $0x508] sm:$0xff]
    %v285 = vld [vmem:[#allocation8 + $0x510] sm:$0xff]
    %v286 = vld [vmem:[#allocation8 + $0x518] sm:$0xff]
    %v287 = vld [vmem:[#allocation8 + $0x520] sm:$0xff]
    %v288 = vld [vmem:[#allocation8 + $0x528] sm:$0xff]
    %v289 = vld [vmem:[#allocation8 + $0x530] sm:$0xff]
    %v290 = vld [vmem:[#allocation8 + $0x538] sm:$0xff]
    %v291 = vld [vmem:[#allocation8 + $0x540] sm:$0xff]
    %v292 = vld [vmem:[#allocation8 + $0x548] sm:$0xff]
    %v293 = vld [vmem:[#allocation8 + $0x550] sm:$0xff]
    %v294 = vld [vmem:[#allocation8 + $0x558] sm:$0xff]
    %v295 = vld [vmem:[#allocation8 + $0x560] sm:$0xff]
    %v296 = vld [vmem:[#allocation8 + $0x568] sm:$0xff]
    %v297 = vld [vmem:[#allocation8 + $0x570] sm:$0xff]
    %v298 = vld [vmem:[#allocation8 + $0x578] sm:$0xff]
    %v299 = vld [vmem:[#allocation8 + $0x580] sm:$0xff]
    %v300 = vld [vmem:[#allocation8 + $0x588] sm:$0xff]
    %v301 = vld [vmem:[#allocation8 + $0x590] sm:$0xff]
    %v302 = vld [vmem:[#allocation8 + $0x598] sm:$0xff]
    %v303 = vld [vmem:[#allocation8 + $0x5a0] sm:$0xff]
    %v304 = vld [vmem:[#allocation8 + $0x5a8] sm:$0xff]
    %v305 = vld [vmem:[#allocation8 + $0x5b0] sm:$0xff]
    %v306 = vld [vmem:[#allocation8 + $0x5b8] sm:$0xff]
    %v307 = vld [vmem:[#allocation8 + $0x5c0] sm:$0xff]
    %v308 = vld [vmem:[#allocation8 + $0x5c8] sm:$0xff]
    %v309 = vld [vmem:[#allocation8 + $0x5d0] sm:$0xff]
    %v310 = vld [vmem:[#allocation8 + $0x5d8] sm:$0xff]
    %v311 = vld [vmem:[#allocation8 + $0x5e0] sm:$0xff]
    %v312 = vld [vmem:[#allocation8 + $0x5e8] sm:$0xff]
    %v313 = vld [vmem:[#allocation8 + $0x5f0] sm:$0xff]
    %v314 = vld [vmem:[#allocation8 + $0x5f8] sm:$0xff]
    %v315 = vld [vmem:[#allocation8 + $0x600] sm:$0xff]
    %v316 = vld [vmem:[#allocation8 + $0x608] sm:$0xff]
    %v317 = vld [vmem:[#allocation8 + $0x610] sm:$0xff]
    %v318 = vld [vmem:[#allocation8 + $0x618] sm:$0xff]
    %v319 = vld [vmem:[#allocation8 + $0x620] sm:$0xff]
    %v320 = vld [vmem:[#allocation8 + $0x628] sm:$0xff]
    %v321 = vld [vmem:[#allocation8 + $0x630] sm:$0xff]
    %v322 = vld [vmem:[#allocation8 + $0x638] sm:$0xff]
    %v323 = vld [vmem:[#allocation8 + $0x640] sm:$0xff]
    %v324 = vld [vmem:[#allocation8 + $0x648] sm:$0xff]
    %v325 = vld [vmem:[#allocation8 + $0x650] sm:$0xff]
    %v326 = vld [vmem:[#allocation8 + $0x658] sm:$0xff]
    %v327 = vld [vmem:[#allocation8 + $0x660] sm:$0xff]
    %v328 = vld [vmem:[#allocation8 + $0x668] sm:$0xff]
    %v329 = vld [vmem:[#allocation8 + $0x670] sm:$0xff]
    %v330 = vld [vmem:[#allocation8 + $0x678] sm:$0xff]
    %v331 = vld [vmem:[#allocation8 + $0x680] sm:$0xff]
    %v332 = vld [vmem:[#allocation8 + $0x688] sm:$0xff]
    %v333 = vld [vmem:[#allocation8 + $0x690] sm:$0xff]
    %v334 = vld [vmem:[#allocation8 + $0x698] sm:$0xff]
    %v335 = vld [vmem:[#allocation8 + $0x6a0] sm:$0xff]
    %v336 = vld [vmem:[#allocation8 + $0x6a8] sm:$0xff]
    %v337 = vld [vmem:[#allocation8 + $0x6b0] sm:$0xff]
    %v338 = vld [vmem:[#allocation8 + $0x6b8] sm:$0xff]
    %v339 = vld [vmem:[#allocation8 + $0x6c0] sm:$0xff]
    %v340 = vld [vmem:[#allocation8 + $0x6c8] sm:$0xff]
    %v341 = vld [vmem:[#allocation8 + $0x6d0] sm:$0xff]
    %v342 = vld [vmem:[#allocation8 + $0x6d8] sm:$0xff]
    %v343 = vld [vmem:[#allocation8 + $0x6e0] sm:$0xff]
    %v344 = vld [vmem:[#allocation8 + $0x6e8] sm:$0xff]
    %v345 = vld [vmem:[#allocation8 + $0x6f0] sm:$0xff]
    %v346 = vld [vmem:[#allocation8 + $0x6f8] sm:$0xff]
    %v347 = vld [vmem:[#allocation8 + $0x700] sm:$0xff]
    %v348 = vld [vmem:[#allocation8 + $0x708] sm:$0xff]
    %v349 = vld [vmem:[#allocation8 + $0x710] sm:$0xff]
    %v350 = vld [vmem:[#allocation8 + $0x718] sm:$0xff]
    %v351 = vld [vmem:[#allocation8 + $0x720] sm:$0xff]
    %v352 = vld [vmem:[#allocation8 + $0x728] sm:$0xff]
    %v353 = vld [vmem:[#allocation8 + $0x730] sm:$0xff]
    %v354 = vld [vmem:[#allocation8 + $0x738] sm:$0xff]
    %v355 = vld [vmem:[#allocation8 + $0x740] sm:$0xff]
    %v356 = vld [vmem:[#allocation8 + $0x748] sm:$0xff]
    %v357 = vld [vmem:[#allocation8 + $0x750] sm:$0xff]
    %v358 = vld [vmem:[#allocation8 + $0x758] sm:$0xff]
    %v359 = vld [vmem:[#allocation8 + $0x760] sm:$0xff]
    %v360 = vld [vmem:[#allocation8 + $0x768] sm:$0xff]
    %v361 = vld [vmem:[#allocation8 + $0x770] sm:$0xff]
    %v362 = vld [vmem:[#allocation8 + $0x778] sm:$0xff]
    %v363 = vld [vmem:[#allocation8 + $0x780] sm:$0xff]
    %v364 = vld [vmem:[#allocation8 + $0x788] sm:$0xff]
    %v365 = vld [vmem:[#allocation8 + $0x790] sm:$0xff]
    %v366 = vld [vmem:[#allocation8 + $0x798] sm:$0xff]
    %v367 = vld [vmem:[#allocation8 + $0x7a0] sm:$0xff]
    %v368 = vld [vmem:[#allocation8 + $0x7a8] sm:$0xff]
    %v369 = vld [vmem:[#allocation8 + $0x7b0] sm:$0xff]
    %v370 = vld [vmem:[#allocation8 + $0x7b8] sm:$0xff]
    %v371 = vld [vmem:[#allocation8 + $0x7c0] sm:$0xff]
    %v372 = vld [vmem:[#allocation8 + $0x7c8] sm:$0xff]
    %v373 = vld [vmem:[#allocation8 + $0x7d0] sm:$0xff]
    %v374 = vld [vmem:[#allocation8 + $0x7d8] sm:$0xff]
    %v375 = vld [vmem:[#allocation8 + $0x7e0] sm:$0xff]
    %v376 = vld [vmem:[#allocation8 + $0x7e8] sm:$0xff]
    %v377 = vld [vmem:[#allocation8 + $0x7f0] sm:$0xff]
    %v378 = vld [vmem:[#allocation8 + $0x7f8] sm:$0xff]
    %v379 = vld [vmem:[%s6] sm:$0xf]
    %v381 = vlaneseq
    %v382 = vshrl.u32 %v381, 7
    %v383 = vsub.s32 0, %v382
    %v384 = vrot.slane %v379, %v383
    %v385 = vlaneseq
    %v386 = vshrl.u32 %v385, 7
    %v387 = vsub.s32 1, %v386
    %v388 = vrot.slane %v379, %v387
    %v389 = vlaneseq
    %v390 = vshrl.u32 %v389, 7
    %v391 = vsub.s32 2, %v390
    %v392 = vrot.slane %v379, %v391
    %v393 = vlaneseq
    %v394 = vshrl.u32 %v393, 7
    %v395 = vsub.s32 3, %v394
    %v396 = vrot.slane %v379, %v395
    %401 = vmatprep.subr.mxu0 %v124
    %402 = vmatpush1.msra.mxu0 %v123
    %403 = vmatprep.subr.mxu0 %v128
    %404 = vmatpush1.msra.mxu0 %v127
    %405 = vmatprep.subr.mxu0 %v132
    %406 = vmatpush1.msra.mxu0 %v131
    %407 = vmatprep.subr.mxu0 %v136
    %408 = vmatpush1.msra.mxu0 %v135
    %409 = vmatprep.subr.mxu0 %v140
    %410 = vmatpush1.msra.mxu0 %v139
    %411 = vmatprep.subr.mxu0 %v144
    %412 = vmatpush1.msra.mxu0 %v143
    %413 = vmatprep.subr.mxu0 %v148
    %414 = vmatpush1.msra.mxu0 %v147
    %415 = vmatprep.subr.mxu0 %v152
    %416 = vmatpush1.msra.mxu0 %v151
    %417 = vmatprep.subr.mxu0 %v156
    %418 = vmatpush1.msra.mxu0 %v155
    %419 = vmatprep.subr.mxu0 %v160
    %420 = vmatpush1.msra.mxu0 %v159
    %421 = vmatprep.subr.mxu0 %v164
    %422 = vmatpush1.msra.mxu0 %v163
    %423 = vmatprep.subr.mxu0 %v168
    %424 = vmatpush1.msra.mxu0 %v167
    %425 = vmatprep.subr.mxu0 %v172
    %426 = vmatpush1.msra.mxu0 %v171
    %427 = vmatprep.subr.mxu0 %v176
    %428 = vmatpush1.msra.mxu0 %v175
    %429 = vmatprep.subr.mxu0 %v180
    %430 = vmatpush1.msra.mxu0 %v179
    %431 = vmatprep.subr.mxu0 %v184
    %432 = vmatpush1.msra.mxu0 %v183
    %433 = vmatprep.subr.mxu0 %v188
    %434 = vmatpush1.msra.mxu0 %v187
    %435 = vmatprep.subr.mxu0 %v192
    %436 = vmatpush1.msra.mxu0 %v191
    %437 = vmatprep.subr.mxu0 %v196
    %438 = vmatpush1.msra.mxu0 %v195
    %439 = vmatprep.subr.mxu0 %v200
    %440 = vmatpush1.msra.mxu0 %v199
    %441 = vmatprep.subr.mxu0 %v204
    %442 = vmatpush1.msra.mxu0 %v203
    %443 = vmatprep.subr.mxu0 %v208
    %444 = vmatpush1.msra.mxu0 %v207
    %445 = vmatprep.subr.mxu0 %v212
    %446 = vmatpush1.msra.mxu0 %v211
    %447 = vmatprep.subr.mxu0 %v216
    %448 = vmatpush1.msra.mxu0 %v215
    %449 = vmatprep.subr.mxu0 %v220
    %450 = vmatpush1.msra.mxu0 %v219
    %451 = vmatprep.subr.mxu0 %v224
    %452 = vmatpush1.msra.mxu0 %v223
    %453 = vmatprep.subr.mxu0 %v228
    %454 = vmatpush1.msra.mxu0 %v227
    %455 = vmatprep.subr.mxu0 %v232
    %456 = vmatpush1.msra.mxu0 %v231
    %457 = vmatprep.subr.mxu0 %v236
    %458 = vmatpush1.msra.mxu0 %v235
    %459 = vmatprep.subr.mxu0 %v240
    %460 = vmatpush1.msra.mxu0 %v239
    %461 = vmatprep.subr.mxu0 %v244
    %462 = vmatpush1.msra.mxu0 %v243
    %463 = vmatprep.subr.mxu0 %v248
    %464 = vmatpush1.msra.mxu0 %v247
    %465 = vmatprep.mubr.f32.mxu0 %v116
    %466 = vmatmul.mubr.f32.gmra.mrb[0].mxu0 %v115
    %v467 = vpop.f32.mrb[0].mxu0
    %v468 = vadd.f32 %v384, %v467
    %v469 = vpop.f32.mrb[0].mxu0
    %v470 = vadd.f32 %v388, %v469
    %471 = vmatprep.mubr.f32.mxu0 %v120
    %472 = vmatmul.mubr.f32.gmra.mrb[0].mxu0 %v119
    %v473 = vpop.f32.mrb[0].mxu0
    %v474 = vadd.f32 %v384, %v473
    %v475 = vpop.f32.mrb[0].mxu0
    %v476 = vadd.f32 %v388, %v475
    %477 = vdwg.mxu0
    %478 = vmatprep.subr.mxu0 %v252
    %479 = vmatpush1.msra.mxu0 %v251
    %480 = vmatprep.subr.mxu0 %v256
    %481 = vmatpush1.msra.mxu0 %v255
    %482 = vmatprep.subr.mxu0 %v260
    %483 = vmatpush1.msra.mxu0 %v259
    %484 = vmatprep.subr.mxu0 %v264
    %485 = vmatpush1.msra.mxu0 %v263
    %486 = vmatprep.subr.mxu0 %v268
    %487 = vmatpush1.msra.mxu0 %v267
    %488 = vmatprep.subr.mxu0 %v272
    %489 = vmatpush1.msra.mxu0 %v271
    %490 = vmatprep.subr.mxu0 %v276
    %491 = vmatpush1.msra.mxu0 %v275
    %492 = vmatprep.subr.mxu0 %v280
    %493 = vmatpush1.msra.mxu0 %v279
    %494 = vmatprep.subr.mxu0 %v284
    %495 = vmatpush1.msra.mxu0 %v283
    %496 = vmatprep.subr.mxu0 %v288
    %497 = vmatpush1.msra.mxu0 %v287
    %498 = vmatprep.subr.mxu0 %v292
    %499 = vmatpush1.msra.mxu0 %v291
    %500 = vmatprep.subr.mxu0 %v296
    %501 = vmatpush1.msra.mxu0 %v295
    %502 = vmatprep.subr.mxu0 %v300
    %503 = vmatpush1.msra.mxu0 %v299
    %504 = vmatprep.subr.mxu0 %v304
    %505 = vmatpush1.msra.mxu0 %v303
    %506 = vmatprep.subr.mxu0 %v308
    %507 = vmatpush1.msra.mxu0 %v307
    %508 = vmatprep.subr.mxu0 %v312
    %509 = vmatpush1.msra.mxu0 %v311
    %510 = vmatprep.subr.mxu0 %v316
    %511 = vmatpush1.msra.mxu0 %v315
    %512 = vmatprep.subr.mxu0 %v320
    %513 = vmatpush1.msra.mxu0 %v319
    %514 = vmatprep.subr.mxu0 %v324
    %515 = vmatpush1.msra.mxu0 %v323
    %516 = vmatprep.subr.mxu0 %v328
    %517 = vmatpush1.msra.mxu0 %v327
    %518 = vmatprep.subr.mxu0 %v332
    %519 = vmatpush1.msra.mxu0 %v331
    %520 = vmatprep.subr.mxu0 %v336
    %521 = vmatpush1.msra.mxu0 %v335
    %522 = vmatprep.subr.mxu0 %v340
    %523 = vmatpush1.msra.mxu0 %v339
    %524 = vmatprep.subr.mxu0 %v344
    %525 = vmatpush1.msra.mxu0 %v343
    %526 = vmatprep.subr.mxu0 %v348
    %527 = vmatpush1.msra.mxu0 %v347
    %528 = vmatprep.subr.mxu0 %v352
    %529 = vmatpush1.msra.mxu0 %v351
    %530 = vmatprep.subr.mxu0 %v356
    %531 = vmatpush1.msra.mxu0 %v355
    %532 = vmatprep.subr.mxu0 %v360
    %533 = vmatpush1.msra.mxu0 %v359
    %534 = vmatprep.subr.mxu0 %v364
    %535 = vmatpush1.msra.mxu0 %v363
    %536 = vmatprep.subr.mxu0 %v368
    %537 = vmatpush1.msra.mxu0 %v367
    %538 = vmatprep.subr.mxu0 %v372
    %539 = vmatpush1.msra.mxu0 %v371
    %540 = vmatprep.subr.mxu0 %v376
    %541 = vmatpush1.msra.mxu0 %v375
    %542 = vmatprep.mubr.f32.mxu0 %v118
    %543 = vmatmul.mubr.f32.gmra.mrb[0].mxu0 %v117
    %v544 = vpop.f32.mrb[0].mxu0
    %v545 = vadd.f32 %v468, %v544
    %v546 = vpop.f32.mrb[0].mxu0
    %v547 = vadd.f32 %v470, %v546
    %548 = vmatprep.mubr.f32.mxu0 %v122
    %549 = vmatmul.mubr.f32.gmra.mrb[0].mxu0 %v121
    %v550 = vpop.f32.mrb[0].mxu0
    %v551 = vadd.f32 %v474, %v550
    %v552 = vpop.f32.mrb[0].mxu0
    %v553 = vadd.f32 %v476, %v552
    %554 = vdwg.mxu0
    %555 = vmatprep.subr.mxu0 %v126
    %556 = vmatpush1.msra.mxu0 %v125
    %557 = vmatprep.subr.mxu0 %v130
    %558 = vmatpush1.msra.mxu0 %v129
    %559 = vmatprep.subr.mxu0 %v134
    %560 = vmatpush1.msra.mxu0 %v133
    %561 = vmatprep.subr.mxu0 %v138
    %562 = vmatpush1.msra.mxu0 %v137
    %563 = vmatprep.subr.mxu0 %v142
    %564 = vmatpush1.msra.mxu0 %v141
    %565 = vmatprep.subr.mxu0 %v146
    %566 = vmatpush1.msra.mxu0 %v145
    %567 = vmatprep.subr.mxu0 %v150
    %568 = vmatpush1.msra.mxu0 %v149
    %569 = vmatprep.subr.mxu0 %v154
    %570 = vmatpush1.msra.mxu0 %v153
    %571 = vmatprep.subr.mxu0 %v158
    %572 = vmatpush1.msra.mxu0 %v157
    %573 = vmatprep.subr.mxu0 %v162
    %574 = vmatpush1.msra.mxu0 %v161
    %575 = vmatprep.subr.mxu0 %v166
    %576 = vmatpush1.msra.mxu0 %v165
    %577 = vmatprep.subr.mxu0 %v170
    %578 = vmatpush1.msra.mxu0 %v169
    %579 = vmatprep.subr.mxu0 %v174
    %580 = vmatpush1.msra.mxu0 %v173
    %581 = vmatprep.subr.mxu0 %v178
    %582 = vmatpush1.msra.mxu0 %v177
    %583 = vmatprep.subr.mxu0 %v182
    %584 = vmatpush1.msra.mxu0 %v181
    %585 = vmatprep.subr.mxu0 %v186
    %586 = vmatpush1.msra.mxu0 %v185
    %587 = vmatprep.subr.mxu0 %v190
    %588 = vmatpush1.msra.mxu0 %v189
    %589 = vmatprep.subr.mxu0 %v194
    %590 = vmatpush1.msra.mxu0 %v193
    %591 = vmatprep.subr.mxu0 %v198
    %592 = vmatpush1.msra.mxu0 %v197
    %593 = vmatprep.subr.mxu0 %v202
    %594 = vmatpush1.msra.mxu0 %v201
    %595 = vmatprep.subr.mxu0 %v206
    %596 = vmatpush1.msra.mxu0 %v205
    %597 = vmatprep.subr.mxu0 %v210
    %598 = vmatpush1.msra.mxu0 %v209
    %599 = vmatprep.subr.mxu0 %v214
    %600 = vmatpush1.msra.mxu0 %v213
    %601 = vmatprep.subr.mxu0 %v218
    %602 = vmatpush1.msra.mxu0 %v217
    %603 = vmatprep.subr.mxu0 %v222
    %604 = vmatpush1.msra.mxu0 %v221
    %605 = vmatprep.subr.mxu0 %v226
    %606 = vmatpush1.msra.mxu0 %v225
    %607 = vmatprep.subr.mxu0 %v230
    %608 = vmatpush1.msra.mxu0 %v229
    %609 = vmatprep.subr.mxu0 %v234
    %610 = vmatpush1.msra.mxu0 %v233
    %611 = vmatprep.subr.mxu0 %v238
    %612 = vmatpush1.msra.mxu0 %v237
    %613 = vmatprep.subr.mxu0 %v242
    %614 = vmatpush1.msra.mxu0 %v241
    %615 = vmatprep.subr.mxu0 %v246
    %616 = vmatpush1.msra.mxu0 %v245
    %617 = vmatprep.subr.mxu0 %v250
    %618 = vmatpush1.msra.mxu0 %v249
    %619 = vmatprep.mubr.f32.mxu0 %v116
    %620 = vmatmul.mubr.f32.gmra.mrb[0].mxu0 %v115
    %v621 = vpop.f32.mrb[0].mxu0
    %v622 = vadd.f32 %v392, %v621
    %v623 = vpop.f32.mrb[0].mxu0
    %v624 = vadd.f32 %v396, %v623
    %625 = vmatprep.mubr.f32.mxu0 %v120
    %626 = vmatmul.mubr.f32.gmra.mrb[0].mxu0 %v119
    %v627 = vpop.f32.mrb[0].mxu0
    %v628 = vadd.f32 %v392, %v627
    %v629 = vpop.f32.mrb[0].mxu0
    %v630 = vadd.f32 %v396, %v629
    %631 = vdwg.mxu0
    %632 = vmatprep.subr.mxu0 %v254
    %633 = vmatpush1.msra.mxu0 %v253
    %634 = vmatprep.subr.mxu0 %v258
    %635 = vmatpush1.msra.mxu0 %v257
    %636 = vmatprep.subr.mxu0 %v262
    %637 = vmatpush1.msra.mxu0 %v261
    %638 = vmatprep.subr.mxu0 %v266
    %639 = vmatpush1.msra.mxu0 %v265
    %640 = vmatprep.subr.mxu0 %v270
    %641 = vmatpush1.msra.mxu0 %v269
    %642 = vmatprep.subr.mxu0 %v274
    %643 = vmatpush1.msra.mxu0 %v273
    %644 = vmatprep.subr.mxu0 %v278
    %645 = vmatpush1.msra.mxu0 %v277
    %646 = vmatprep.subr.mxu0 %v282
    %647 = vmatpush1.msra.mxu0 %v281
    %648 = vmatprep.subr.mxu0 %v286
    %649 = vmatpush1.msra.mxu0 %v285
    %650 = vmatprep.subr.mxu0 %v290
    %651 = vmatpush1.msra.mxu0 %v289
    %652 = vmatprep.subr.mxu0 %v294
    %653 = vmatpush1.msra.mxu0 %v293
    %654 = vmatprep.subr.mxu0 %v298
    %655 = vmatpush1.msra.mxu0 %v297
    %656 = vmatprep.subr.mxu0 %v302
    %657 = vmatpush1.msra.mxu0 %v301
    %658 = vmatprep.subr.mxu0 %v306
    %659 = vmatpush1.msra.mxu0 %v305
    %660 = vmatprep.subr.mxu0 %v310
    %661 = vmatpush1.msra.mxu0 %v309
    %662 = vmatprep.subr.mxu0 %v314
    %663 = vmatpush1.msra.mxu0 %v313
    %664 = vmatprep.subr.mxu0 %v318
    %665 = vmatpush1.msra.mxu0 %v317
    %666 = vmatprep.subr.mxu0 %v322
    %667 = vmatpush1.msra.mxu0 %v321
    %668 = vmatprep.subr.mxu0 %v326
    %669 = vmatpush1.msra.mxu0 %v325
    %670 = vmatprep.subr.mxu0 %v330
    %671 = vmatpush1.msra.mxu0 %v329
    %672 = vmatprep.subr.mxu0 %v334
    %673 = vmatpush1.msra.mxu0 %v333
    %674 = vmatprep.subr.mxu0 %v338
    %675 = vmatpush1.msra.mxu0 %v337
    %676 = vmatprep.subr.mxu0 %v342
    %677 = vmatpush1.msra.mxu0 %v341
    %678 = vmatprep.subr.mxu0 %v346
    %679 = vmatpush1.msra.mxu0 %v345
    %680 = vmatprep.subr.mxu0 %v350
    %681 = vmatpush1.msra.mxu0 %v349
    %682 = vmatprep.subr.mxu0 %v354
    %683 = vmatpush1.msra.mxu0 %v353
    %684 = vmatprep.subr.mxu0 %v358
    %685 = vmatpush1.msra.mxu0 %v357
    %686 = vmatprep.subr.mxu0 %v362
    %687 = vmatpush1.msra.mxu0 %v361
    %688 = vmatprep.subr.mxu0 %v366
    %689 = vmatpush1.msra.mxu0 %v365
    %690 = vmatprep.subr.mxu0 %v370
    %691 = vmatpush1.msra.mxu0 %v369
    %692 = vmatprep.subr.mxu0 %v374
    %693 = vmatpush1.msra.mxu0 %v373
    %694 = vmatprep.subr.mxu0 %v378
    %695 = vmatpush1.msra.mxu0 %v377
    %696 = vmatprep.mubr.f32.mxu0 %v118
    %697 = vmatmul.mubr.f32.gmra.mrb[0].mxu0 %v117
    %v698 = vpop.f32.mrb[0].mxu0
    %v699 = vadd.f32 %v622, %v698
    %v700 = vpop.f32.mrb[0].mxu0
    %v701 = vadd.f32 %v624, %v700
    %702 = vmatprep.mubr.f32.mxu0 %v122
    %703 = vmatmul.mubr.f32.gmra.mrb[0].mxu0 %v121
    %v704 = vpop.f32.mrb[0].mxu0
    %v705 = vadd.f32 %v628, %v704
    %v706 = vpop.f32.mrb[0].mxu0
    %v707 = vadd.f32 %v630, %v706
    %708 = vdwg.mxu0
    %709 = vst [vmem:[#allocation13] sm:$0xff] %v545
    %710 = vst [vmem:[#allocation13 + $0x8] sm:$0xff] %v547
    %711 = vst [vmem:[#allocation13 + $0x10] sm:$0xff] %v699
    %712 = vst [vmem:[#allocation13 + $0x18] sm:$0xff] %v701
    %713 = vst [vmem:[#allocation13 + $0x20] sm:$0xff] %v551
    %714 = vst [vmem:[#allocation13 + $0x28] sm:$0xff] %v553
    %715 = vst [vmem:[#allocation13 + $0x30] sm:$0xff] %v705
    %716 = vst [vmem:[#allocation13 + $0x38] sm:$0xff] %v707
    %v717 = vld [vmem:[#allocation5] sm:$0xff]
    %v718 = vld [vmem:[#allocation5 + $0x8] sm:$0xff]
    %v719 = vld [vmem:[#allocation5 + $0x10] sm:$0xff]
    %v720 = vld [vmem:[#allocation5 + $0x18] sm:$0xff]
    %v721 = vld [vmem:[#allocation5 + $0x20] sm:$0xff]
    %v722 = vld [vmem:[#allocation5 + $0x28] sm:$0xff]
    %v723 = vld [vmem:[#allocation5 + $0x30] sm:$0xff]
    %v724 = vld [vmem:[#allocation5 + $0x38] sm:$0xff]
    %v725 = vld [vmem:[#allocation10] sm:$0xff]
    %v726 = vld [vmem:[#allocation10 + $0x8] sm:$0xff]
    %v727 = vld [vmem:[#allocation10 + $0x10] sm:$0xff]
    %v728 = vld [vmem:[#allocation10 + $0x18] sm:$0xff]
    %v729 = vld [vmem:[#allocation10 + $0x20] sm:$0xff]
    %v730 = vld [vmem:[#allocation10 + $0x28] sm:$0xff]
    %v731 = vld [vmem:[#allocation10 + $0x30] sm:$0xff]
    %v732 = vld [vmem:[#allocation10 + $0x38] sm:$0xff]
    %v733 = vld [vmem:[#allocation10 + $0x40] sm:$0xff]
    %v734 = vld [vmem:[#allocation10 + $0x48] sm:$0xff]
    %v735 = vld [vmem:[#allocation10 + $0x50] sm:$0xff]
    %v736 = vld [vmem:[#allocation10 + $0x58] sm:$0xff]
    %v737 = vld [vmem:[#allocation10 + $0x60] sm:$0xff]
    %v738 = vld [vmem:[#allocation10 + $0x68] sm:$0xff]
    %v739 = vld [vmem:[#allocation10 + $0x70] sm:$0xff]
    %v740 = vld [vmem:[#allocation10 + $0x78] sm:$0xff]
    %v741 = vld [vmem:[#allocation10 + $0x80] sm:$0xff]
    %v742 = vld [vmem:[#allocation10 + $0x88] sm:$0xff]
    %v743 = vld [vmem:[#allocation10 + $0x90] sm:$0xff]
    %v744 = vld [vmem:[#allocation10 + $0x98] sm:$0xff]
    %v745 = vld [vmem:[#allocation10 + $0xa0] sm:$0xff]
    %v746 = vld [vmem:[#allocation10 + $0xa8] sm:$0xff]
    %v747 = vld [vmem:[#allocation10 + $0xb0] sm:$0xff]
    %v748 = vld [vmem:[#allocation10 + $0xb8] sm:$0xff]
    %v749 = vld [vmem:[#allocation10 + $0xc0] sm:$0xff]
    %v750 = vld [vmem:[#allocation10 + $0xc8] sm:$0xff]
    %v751 = vld [vmem:[#allocation10 + $0xd0] sm:$0xff]
    %v752 = vld [vmem:[#allocation10 + $0xd8] sm:$0xff]
    %v753 = vld [vmem:[#allocation10 + $0xe0] sm:$0xff]
    %v754 = vld [vmem:[#allocation10 + $0xe8] sm:$0xff]
    %v755 = vld [vmem:[#allocation10 + $0xf0] sm:$0xff]
    %v756 = vld [vmem:[#allocation10 + $0xf8] sm:$0xff]
    %v757 = vld [vmem:[#allocation10 + $0x100] sm:$0xff]
    %v758 = vld [vmem:[#allocation10 + $0x108] sm:$0xff]
    %v759 = vld [vmem:[#allocation10 + $0x110] sm:$0xff]
    %v760 = vld [vmem:[#allocation10 + $0x118] sm:$0xff]
    %v761 = vld [vmem:[#allocation10 + $0x120] sm:$0xff]
    %v762 = vld [vmem:[#allocation10 + $0x128] sm:$0xff]
    %v763 = vld [vmem:[#allocation10 + $0x130] sm:$0xff]
    %v764 = vld [vmem:[#allocation10 + $0x138] sm:$0xff]
    %v765 = vld [vmem:[#allocation10 + $0x140] sm:$0xff]
    %v766 = vld [vmem:[#allocation10 + $0x148] sm:$0xff]
    %v767 = vld [vmem:[#allocation10 + $0x150] sm:$0xff]
    %v768 = vld [vmem:[#allocation10 + $0x158] sm:$0xff]
    %v769 = vld [vmem:[#allocation10 + $0x160] sm:$0xff]
    %v770 = vld [vmem:[#allocation10 + $0x168] sm:$0xff]
    %v771 = vld [vmem:[#allocation10 + $0x170] sm:$0xff]
    %v772 = vld [vmem:[#allocation10 + $0x178] sm:$0xff]
    %v773 = vld [vmem:[#allocation10 + $0x180] sm:$0xff]
    %v774 = vld [vmem:[#allocation10 + $0x188] sm:$0xff]
    %v775 = vld [vmem:[#allocation10 + $0x190] sm:$0xff]
    %v776 = vld [vmem:[#allocation10 + $0x198] sm:$0xff]
    %v777 = vld [vmem:[#allocation10 + $0x1a0] sm:$0xff]
    %v778 = vld [vmem:[#allocation10 + $0x1a8] sm:$0xff]
    %v779 = vld [vmem:[#allocation10 + $0x1b0] sm:$0xff]
    %v780 = vld [vmem:[#allocation10 + $0x1b8] sm:$0xff]
    %v781 = vld [vmem:[#allocation10 + $0x1c0] sm:$0xff]
    %v782 = vld [vmem:[#allocation10 + $0x1c8] sm:$0xff]
    %v783 = vld [vmem:[#allocation10 + $0x1d0] sm:$0xff]
    %v784 = vld [vmem:[#allocation10 + $0x1d8] sm:$0xff]
    %v785 = vld [vmem:[#allocation10 + $0x1e0] sm:$0xff]
    %v786 = vld [vmem:[#allocation10 + $0x1e8] sm:$0xff]
    %v787 = vld [vmem:[#allocation10 + $0x1f0] sm:$0xff]
    %v788 = vld [vmem:[#allocation10 + $0x1f8] sm:$0xff]
    %v789 = vld [vmem:[#allocation10 + $0x200] sm:$0xff]
    %v790 = vld [vmem:[#allocation10 + $0x208] sm:$0xff]
    %v791 = vld [vmem:[#allocation10 + $0x210] sm:$0xff]
    %v792 = vld [vmem:[#allocation10 + $0x218] sm:$0xff]
    %v793 = vld [vmem:[#allocation10 + $0x220] sm:$0xff]
    %v794 = vld [vmem:[#allocation10 + $0x228] sm:$0xff]
    %v795 = vld [vmem:[#allocation10 + $0x230] sm:$0xff]
    %v796 = vld [vmem:[#allocation10 + $0x238] sm:$0xff]
    %v797 = vld [vmem:[#allocation10 + $0x240] sm:$0xff]
    %v798 = vld [vmem:[#allocation10 + $0x248] sm:$0xff]
    %v799 = vld [vmem:[#allocation10 + $0x250] sm:$0xff]
    %v800 = vld [vmem:[#allocation10 + $0x258] sm:$0xff]
    %v801 = vld [vmem:[#allocation10 + $0x260] sm:$0xff]
    %v802 = vld [vmem:[#allocation10 + $0x268] sm:$0xff]
    %v803 = vld [vmem:[#allocation10 + $0x270] sm:$0xff]
    %v804 = vld [vmem:[#allocation10 + $0x278] sm:$0xff]
    %v805 = vld [vmem:[#allocation10 + $0x280] sm:$0xff]
    %v806 = vld [vmem:[#allocation10 + $0x288] sm:$0xff]
    %v807 = vld [vmem:[#allocation10 + $0x290] sm:$0xff]
    %v808 = vld [vmem:[#allocation10 + $0x298] sm:$0xff]
    %v809 = vld [vmem:[#allocation10 + $0x2a0] sm:$0xff]
    %v810 = vld [vmem:[#allocation10 + $0x2a8] sm:$0xff]
    %v811 = vld [vmem:[#allocation10 + $0x2b0] sm:$0xff]
    %v812 = vld [vmem:[#allocation10 + $0x2b8] sm:$0xff]
    %v813 = vld [vmem:[#allocation10 + $0x2c0] sm:$0xff]
    %v814 = vld [vmem:[#allocation10 + $0x2c8] sm:$0xff]
    %v815 = vld [vmem:[#allocation10 + $0x2d0] sm:$0xff]
    %v816 = vld [vmem:[#allocation10 + $0x2d8] sm:$0xff]
    %v817 = vld [vmem:[#allocation10 + $0x2e0] sm:$0xff]
    %v818 = vld [vmem:[#allocation10 + $0x2e8] sm:$0xff]
    %v819 = vld [vmem:[#allocation10 + $0x2f0] sm:$0xff]
    %v820 = vld [vmem:[#allocation10 + $0x2f8] sm:$0xff]
    %v821 = vld [vmem:[#allocation10 + $0x300] sm:$0xff]
    %v822 = vld [vmem:[#allocation10 + $0x308] sm:$0xff]
    %v823 = vld [vmem:[#allocation10 + $0x310] sm:$0xff]
    %v824 = vld [vmem:[#allocation10 + $0x318] sm:$0xff]
    %v825 = vld [vmem:[#allocation10 + $0x320] sm:$0xff]
    %v826 = vld [vmem:[#allocation10 + $0x328] sm:$0xff]
    %v827 = vld [vmem:[#allocation10 + $0x330] sm:$0xff]
    %v828 = vld [vmem:[#allocation10 + $0x338] sm:$0xff]
    %v829 = vld [vmem:[#allocation10 + $0x340] sm:$0xff]
    %v830 = vld [vmem:[#allocation10 + $0x348] sm:$0xff]
    %v831 = vld [vmem:[#allocation10 + $0x350] sm:$0xff]
    %v832 = vld [vmem:[#allocation10 + $0x358] sm:$0xff]
    %v833 = vld [vmem:[#allocation10 + $0x360] sm:$0xff]
    %v834 = vld [vmem:[#allocation10 + $0x368] sm:$0xff]
    %v835 = vld [vmem:[#allocation10 + $0x370] sm:$0xff]
    %v836 = vld [vmem:[#allocation10 + $0x378] sm:$0xff]
    %v837 = vld [vmem:[#allocation10 + $0x380] sm:$0xff]
    %v838 = vld [vmem:[#allocation10 + $0x388] sm:$0xff]
    %v839 = vld [vmem:[#allocation10 + $0x390] sm:$0xff]
    %v840 = vld [vmem:[#allocation10 + $0x398] sm:$0xff]
    %v841 = vld [vmem:[#allocation10 + $0x3a0] sm:$0xff]
    %v842 = vld [vmem:[#allocation10 + $0x3a8] sm:$0xff]
    %v843 = vld [vmem:[#allocation10 + $0x3b0] sm:$0xff]
    %v844 = vld [vmem:[#allocation10 + $0x3b8] sm:$0xff]
    %v845 = vld [vmem:[#allocation10 + $0x3c0] sm:$0xff]
    %v846 = vld [vmem:[#allocation10 + $0x3c8] sm:$0xff]
    %v847 = vld [vmem:[#allocation10 + $0x3d0] sm:$0xff]
    %v848 = vld [vmem:[#allocation10 + $0x3d8] sm:$0xff]
    %v849 = vld [vmem:[#allocation10 + $0x3e0] sm:$0xff]
    %v850 = vld [vmem:[#allocation10 + $0x3e8] sm:$0xff]
    %v851 = vld [vmem:[#allocation10 + $0x3f0] sm:$0xff]
    %v852 = vld [vmem:[#allocation10 + $0x3f8] sm:$0xff]
    %v853 = vld [vmem:[#allocation10 + $0x400] sm:$0xff]
    %v854 = vld [vmem:[#allocation10 + $0x408] sm:$0xff]
    %v855 = vld [vmem:[#allocation10 + $0x410] sm:$0xff]
    %v856 = vld [vmem:[#allocation10 + $0x418] sm:$0xff]
    %v857 = vld [vmem:[#allocation10 + $0x420] sm:$0xff]
    %v858 = vld [vmem:[#allocation10 + $0x428] sm:$0xff]
    %v859 = vld [vmem:[#allocation10 + $0x430] sm:$0xff]
    %v860 = vld [vmem:[#allocation10 + $0x438] sm:$0xff]
    %v861 = vld [vmem:[#allocation10 + $0x440] sm:$0xff]
    %v862 = vld [vmem:[#allocation10 + $0x448] sm:$0xff]
    %v863 = vld [vmem:[#allocation10 + $0x450] sm:$0xff]
    %v864 = vld [vmem:[#allocation10 + $0x458] sm:$0xff]
    %v865 = vld [vmem:[#allocation10 + $0x460] sm:$0xff]
    %v866 = vld [vmem:[#allocation10 + $0x468] sm:$0xff]
    %v867 = vld [vmem:[#allocation10 + $0x470] sm:$0xff]
    %v868 = vld [vmem:[#allocation10 + $0x478] sm:$0xff]
    %v869 = vld [vmem:[#allocation10 + $0x480] sm:$0xff]
    %v870 = vld [vmem:[#allocation10 + $0x488] sm:$0xff]
    %v871 = vld [vmem:[#allocation10 + $0x490] sm:$0xff]
    %v872 = vld [vmem:[#allocation10 + $0x498] sm:$0xff]
    %v873 = vld [vmem:[#allocation10 + $0x4a0] sm:$0xff]
    %v874 = vld [vmem:[#allocation10 + $0x4a8] sm:$0xff]
    %v875 = vld [vmem:[#allocation10 + $0x4b0] sm:$0xff]
    %v876 = vld [vmem:[#allocation10 + $0x4b8] sm:$0xff]
    %v877 = vld [vmem:[#allocation10 + $0x4c0] sm:$0xff]
    %v878 = vld [vmem:[#allocation10 + $0x4c8] sm:$0xff]
    %v879 = vld [vmem:[#allocation10 + $0x4d0] sm:$0xff]
    %v880 = vld [vmem:[#allocation10 + $0x4d8] sm:$0xff]
    %v881 = vld [vmem:[#allocation10 + $0x4e0] sm:$0xff]
    %v882 = vld [vmem:[#allocation10 + $0x4e8] sm:$0xff]
    %v883 = vld [vmem:[#allocation10 + $0x4f0] sm:$0xff]
    %v884 = vld [vmem:[#allocation10 + $0x4f8] sm:$0xff]
    %v885 = vld [vmem:[#allocation10 + $0x500] sm:$0xff]
    %v886 = vld [vmem:[#allocation10 + $0x508] sm:$0xff]
    %v887 = vld [vmem:[#allocation10 + $0x510] sm:$0xff]
    %v888 = vld [vmem:[#allocation10 + $0x518] sm:$0xff]
    %v889 = vld [vmem:[#allocation10 + $0x520] sm:$0xff]
    %v890 = vld [vmem:[#allocation10 + $0x528] sm:$0xff]
    %v891 = vld [vmem:[#allocation10 + $0x530] sm:$0xff]
    %v892 = vld [vmem:[#allocation10 + $0x538] sm:$0xff]
    %v893 = vld [vmem:[#allocation10 + $0x540] sm:$0xff]
    %v894 = vld [vmem:[#allocation10 + $0x548] sm:$0xff]
    %v895 = vld [vmem:[#allocation10 + $0x550] sm:$0xff]
    %v896 = vld [vmem:[#allocation10 + $0x558] sm:$0xff]
    %v897 = vld [vmem:[#allocation10 + $0x560] sm:$0xff]
    %v898 = vld [vmem:[#allocation10 + $0x568] sm:$0xff]
    %v899 = vld [vmem:[#allocation10 + $0x570] sm:$0xff]
    %v900 = vld [vmem:[#allocation10 + $0x578] sm:$0xff]
    %v901 = vld [vmem:[#allocation10 + $0x580] sm:$0xff]
    %v902 = vld [vmem:[#allocation10 + $0x588] sm:$0xff]
    %v903 = vld [vmem:[#allocation10 + $0x590] sm:$0xff]
    %v904 = vld [vmem:[#allocation10 + $0x598] sm:$0xff]
    %v905 = vld [vmem:[#allocation10 + $0x5a0] sm:$0xff]
    %v906 = vld [vmem:[#allocation10 + $0x5a8] sm:$0xff]
    %v907 = vld [vmem:[#allocation10 + $0x5b0] sm:$0xff]
    %v908 = vld [vmem:[#allocation10 + $0x5b8] sm:$0xff]
    %v909 = vld [vmem:[#allocation10 + $0x5c0] sm:$0xff]
    %v910 = vld [vmem:[#allocation10 + $0x5c8] sm:$0xff]
    %v911 = vld [vmem:[#allocation10 + $0x5d0] sm:$0xff]
    %v912 = vld [vmem:[#allocation10 + $0x5d8] sm:$0xff]
    %v913 = vld [vmem:[#allocation10 + $0x5e0] sm:$0xff]
    %v914 = vld [vmem:[#allocation10 + $0x5e8] sm:$0xff]
    %v915 = vld [vmem:[#allocation10 + $0x5f0] sm:$0xff]
    %v916 = vld [vmem:[#allocation10 + $0x5f8] sm:$0xff]
    %v917 = vld [vmem:[#allocation10 + $0x600] sm:$0xff]
    %v918 = vld [vmem:[#allocation10 + $0x608] sm:$0xff]
    %v919 = vld [vmem:[#allocation10 + $0x610] sm:$0xff]
    %v920 = vld [vmem:[#allocation10 + $0x618] sm:$0xff]
    %v921 = vld [vmem:[#allocation10 + $0x620] sm:$0xff]
    %v922 = vld [vmem:[#allocation10 + $0x628] sm:$0xff]
    %v923 = vld [vmem:[#allocation10 + $0x630] sm:$0xff]
    %v924 = vld [vmem:[#allocation10 + $0x638] sm:$0xff]
    %v925 = vld [vmem:[#allocation10 + $0x640] sm:$0xff]
    %v926 = vld [vmem:[#allocation10 + $0x648] sm:$0xff]
    %v927 = vld [vmem:[#allocation10 + $0x650] sm:$0xff]
    %v928 = vld [vmem:[#allocation10 + $0x658] sm:$0xff]
    %v929 = vld [vmem:[#allocation10 + $0x660] sm:$0xff]
    %v930 = vld [vmem:[#allocation10 + $0x668] sm:$0xff]
    %v931 = vld [vmem:[#allocation10 + $0x670] sm:$0xff]
    %v932 = vld [vmem:[#allocation10 + $0x678] sm:$0xff]
    %v933 = vld [vmem:[#allocation10 + $0x680] sm:$0xff]
    %v934 = vld [vmem:[#allocation10 + $0x688] sm:$0xff]
    %v935 = vld [vmem:[#allocation10 + $0x690] sm:$0xff]
    %v936 = vld [vmem:[#allocation10 + $0x698] sm:$0xff]
    %v937 = vld [vmem:[#allocation10 + $0x6a0] sm:$0xff]
    %v938 = vld [vmem:[#allocation10 + $0x6a8] sm:$0xff]
    %v939 = vld [vmem:[#allocation10 + $0x6b0] sm:$0xff]
    %v940 = vld [vmem:[#allocation10 + $0x6b8] sm:$0xff]
    %v941 = vld [vmem:[#allocation10 + $0x6c0] sm:$0xff]
    %v942 = vld [vmem:[#allocation10 + $0x6c8] sm:$0xff]
    %v943 = vld [vmem:[#allocation10 + $0x6d0] sm:$0xff]
    %v944 = vld [vmem:[#allocation10 + $0x6d8] sm:$0xff]
    %v945 = vld [vmem:[#allocation10 + $0x6e0] sm:$0xff]
    %v946 = vld [vmem:[#allocation10 + $0x6e8] sm:$0xff]
    %v947 = vld [vmem:[#allocation10 + $0x6f0] sm:$0xff]
    %v948 = vld [vmem:[#allocation10 + $0x6f8] sm:$0xff]
    %v949 = vld [vmem:[#allocation10 + $0x700] sm:$0xff]
    %v950 = vld [vmem:[#allocation10 + $0x708] sm:$0xff]
    %v951 = vld [vmem:[#allocation10 + $0x710] sm:$0xff]
    %v952 = vld [vmem:[#allocation10 + $0x718] sm:$0xff]
    %v953 = vld [vmem:[#allocation10 + $0x720] sm:$0xff]
    %v954 = vld [vmem:[#allocation10 + $0x728] sm:$0xff]
    %v955 = vld [vmem:[#allocation10 + $0x730] sm:$0xff]
    %v956 = vld [vmem:[#allocation10 + $0x738] sm:$0xff]
    %v957 = vld [vmem:[#allocation10 + $0x740] sm:$0xff]
    %v958 = vld [vmem:[#allocation10 + $0x748] sm:$0xff]
    %v959 = vld [vmem:[#allocation10 + $0x750] sm:$0xff]
    %v960 = vld [vmem:[#allocation10 + $0x758] sm:$0xff]
    %v961 = vld [vmem:[#allocation10 + $0x760] sm:$0xff]
    %v962 = vld [vmem:[#allocation10 + $0x768] sm:$0xff]
    %v963 = vld [vmem:[#allocation10 + $0x770] sm:$0xff]
    %v964 = vld [vmem:[#allocation10 + $0x778] sm:$0xff]
    %v965 = vld [vmem:[#allocation10 + $0x780] sm:$0xff]
    %v966 = vld [vmem:[#allocation10 + $0x788] sm:$0xff]
    %v967 = vld [vmem:[#allocation10 + $0x790] sm:$0xff]
    %v968 = vld [vmem:[#allocation10 + $0x798] sm:$0xff]
    %v969 = vld [vmem:[#allocation10 + $0x7a0] sm:$0xff]
    %v970 = vld [vmem:[#allocation10 + $0x7a8] sm:$0xff]
    %v971 = vld [vmem:[#allocation10 + $0x7b0] sm:$0xff]
    %v972 = vld [vmem:[#allocation10 + $0x7b8] sm:$0xff]
    %v973 = vld [vmem:[#allocation10 + $0x7c0] sm:$0xff]
    %v974 = vld [vmem:[#allocation10 + $0x7c8] sm:$0xff]
    %v975 = vld [vmem:[#allocation10 + $0x7d0] sm:$0xff]
    %v976 = vld [vmem:[#allocation10 + $0x7d8] sm:$0xff]
    %v977 = vld [vmem:[#allocation10 + $0x7e0] sm:$0xff]
    %v978 = vld [vmem:[#allocation10 + $0x7e8] sm:$0xff]
    %v979 = vld [vmem:[#allocation10 + $0x7f0] sm:$0xff]
    %v980 = vld [vmem:[#allocation10 + $0x7f8] sm:$0xff]
    %v981 = vld [vmem:[%s7] sm:$0xf]
    %v983 = vlaneseq
    %v984 = vshrl.u32 %v983, 7
    %v985 = vsub.s32 0, %v984
    %v986 = vrot.slane %v981, %v985
    %v987 = vlaneseq
    %v988 = vshrl.u32 %v987, 7
    %v989 = vsub.s32 1, %v988
    %v990 = vrot.slane %v981, %v989
    %v991 = vlaneseq
    %v992 = vshrl.u32 %v991, 7
    %v993 = vsub.s32 2, %v992
    %v994 = vrot.slane %v981, %v993
    %v995 = vlaneseq
    %v996 = vshrl.u32 %v995, 7
    %v997 = vsub.s32 3, %v996
    %v998 = vrot.slane %v981, %v997
    %1003 = vmatprep.subr.mxu0 %v726
    %1004 = vmatpush1.msra.mxu0 %v725
    %1005 = vmatprep.subr.mxu0 %v730
    %1006 = vmatpush1.msra.mxu0 %v729
    %1007 = vmatprep.subr.mxu0 %v734
    %1008 = vmatpush1.msra.mxu0 %v733
    %1009 = vmatprep.subr.mxu0 %v738
    %1010 = vmatpush1.msra.mxu0 %v737
    %1011 = vmatprep.subr.mxu0 %v742
    %1012 = vmatpush1.msra.mxu0 %v741
    %1013 = vmatprep.subr.mxu0 %v746
    %1014 = vmatpush1.msra.mxu0 %v745
    %1015 = vmatprep.subr.mxu0 %v750
    %1016 = vmatpush1.msra.mxu0 %v749
    %1017 = vmatprep.subr.mxu0 %v754
    %1018 = vmatpush1.msra.mxu0 %v753
    %1019 = vmatprep.subr.mxu0 %v758
    %1020 = vmatpush1.msra.mxu0 %v757
    %1021 = vmatprep.subr.mxu0 %v762
    %1022 = vmatpush1.msra.mxu0 %v761
    %1023 = vmatprep.subr.mxu0 %v766
    %1024 = vmatpush1.msra.mxu0 %v765
    %1025 = vmatprep.subr.mxu0 %v770
    %1026 = vmatpush1.msra.mxu0 %v769
    %1027 = vmatprep.subr.mxu0 %v774
    %1028 = vmatpush1.msra.mxu0 %v773
    %1029 = vmatprep.subr.mxu0 %v778
    %1030 = vmatpush1.msra.mxu0 %v777
    %1031 = vmatprep.subr.mxu0 %v782
    %1032 = vmatpush1.msra.mxu0 %v781
    %1033 = vmatprep.subr.mxu0 %v786
    %1034 = vmatpush1.msra.mxu0 %v785
    %1035 = vmatprep.subr.mxu0 %v790
    %1036 = vmatpush1.msra.mxu0 %v789
    %1037 = vmatprep.subr.mxu0 %v794
    %1038 = vmatpush1.msra.mxu0 %v793
    %1039 = vmatprep.subr.mxu0 %v798
    %1040 = vmatpush1.msra.mxu0 %v797
    %1041 = vmatprep.subr.mxu0 %v802
    %1042 = vmatpush1.msra.mxu0 %v801
    %1043 = vmatprep.subr.mxu0 %v806
    %1044 = vmatpush1.msra.mxu0 %v805
    %1045 = vmatprep.subr.mxu0 %v810
    %1046 = vmatpush1.msra.mxu0 %v809
    %1047 = vmatprep.subr.mxu0 %v814
    %1048 = vmatpush1.msra.mxu0 %v813
    %1049 = vmatprep.subr.mxu0 %v818
    %1050 = vmatpush1.msra.mxu0 %v817
    %1051 = vmatprep.subr.mxu0 %v822
    %1052 = vmatpush1.msra.mxu0 %v821
    %1053 = vmatprep.subr.mxu0 %v826
    %1054 = vmatpush1.msra.mxu0 %v825
    %1055 = vmatprep.subr.mxu0 %v830
    %1056 = vmatpush1.msra.mxu0 %v829
    %1057 = vmatprep.subr.mxu0 %v834
    %1058 = vmatpush1.msra.mxu0 %v833
    %1059 = vmatprep.subr.mxu0 %v838
    %1060 = vmatpush1.msra.mxu0 %v837
    %1061 = vmatprep.subr.mxu0 %v842
    %1062 = vmatpush1.msra.mxu0 %v841
    %1063 = vmatprep.subr.mxu0 %v846
    %1064 = vmatpush1.msra.mxu0 %v845
    %1065 = vmatprep.subr.mxu0 %v850
    %1066 = vmatpush1.msra.mxu0 %v849
    %1067 = vmatprep.mubr.f32.mxu0 %v718
    %1068 = vmatmul.mubr.f32.gmra.mrb[0].mxu0 %v717
    %v1069 = vpop.f32.mrb[0].mxu0
    %v1070 = vadd.f32 %v986, %v1069
    %v1071 = vpop.f32.mrb[0].mxu0
    %v1072 = vadd.f32 %v990, %v1071
    %1073 = vmatprep.mubr.f32.mxu0 %v722
    %1074 = vmatmul.mubr.f32.gmra.mrb[0].mxu0 %v721
    %v1075 = vpop.f32.mrb[0].mxu0
    %v1076 = vadd.f32 %v986, %v1075
    %v1077 = vpop.f32.mrb[0].mxu0
    %v1078 = vadd.f32 %v990, %v1077
    %1079 = vdwg.mxu0
    %1080 = vmatprep.subr.mxu0 %v854
    %1081 = vmatpush1.msra.mxu0 %v853
    %1082 = vmatprep.subr.mxu0 %v858
    %1083 = vmatpush1.msra.mxu0 %v857
    %1084 = vmatprep.subr.mxu0 %v862
    %1085 = vmatpush1.msra.mxu0 %v861
    %1086 = vmatprep.subr.mxu0 %v866
    %1087 = vmatpush1.msra.mxu0 %v865
    %1088 = vmatprep.subr.mxu0 %v870
    %1089 = vmatpush1.msra.mxu0 %v869
    %1090 = vmatprep.subr.mxu0 %v874
    %1091 = vmatpush1.msra.mxu0 %v873
    %1092 = vmatprep.subr.mxu0 %v878
    %1093 = vmatpush1.msra.mxu0 %v877
    %1094 = vmatprep.subr.mxu0 %v882
    %1095 = vmatpush1.msra.mxu0 %v881
    %1096 = vmatprep.subr.mxu0 %v886
    %1097 = vmatpush1.msra.mxu0 %v885
    %1098 = vmatprep.subr.mxu0 %v890
    %1099 = vmatpush1.msra.mxu0 %v889
    %1100 = vmatprep.subr.mxu0 %v894
    %1101 = vmatpush1.msra.mxu0 %v893
    %1102 = vmatprep.subr.mxu0 %v898
    %1103 = vmatpush1.msra.mxu0 %v897
    %1104 = vmatprep.subr.mxu0 %v902
    %1105 = vmatpush1.msra.mxu0 %v901
    %1106 = vmatprep.subr.mxu0 %v906
    %1107 = vmatpush1.msra.mxu0 %v905
    %1108 = vmatprep.subr.mxu0 %v910
    %1109 = vmatpush1.msra.mxu0 %v909
    %1110 = vmatprep.subr.mxu0 %v914
    %1111 = vmatpush1.msra.mxu0 %v913
    %1112 = vmatprep.subr.mxu0 %v918
    %1113 = vmatpush1.msra.mxu0 %v917
    %1114 = vmatprep.subr.mxu0 %v922
    %1115 = vmatpush1.msra.mxu0 %v921
    %1116 = vmatprep.subr.mxu0 %v926
    %1117 = vmatpush1.msra.mxu0 %v925
    %1118 = vmatprep.subr.mxu0 %v930
    %1119 = vmatpush1.msra.mxu0 %v929
    %1120 = vmatprep.subr.mxu0 %v934
    %1121 = vmatpush1.msra.mxu0 %v933
    %1122 = vmatprep.subr.mxu0 %v938
    %1123 = vmatpush1.msra.mxu0 %v937
    %1124 = vmatprep.subr.mxu0 %v942
    %1125 = vmatpush1.msra.mxu0 %v941
    %1126 = vmatprep.subr.mxu0 %v946
    %1127 = vmatpush1.msra.mxu0 %v945
    %1128 = vmatprep.subr.mxu0 %v950
    %1129 = vmatpush1.msra.mxu0 %v949
    %1130 = vmatprep.subr.mxu0 %v954
    %1131 = vmatpush1.msra.mxu0 %v953
    %1132 = vmatprep.subr.mxu0 %v958
    %1133 = vmatpush1.msra.mxu0 %v957
    %1134 = vmatprep.subr.mxu0 %v962
    %1135 = vmatpush1.msra.mxu0 %v961
    %1136 = vmatprep.subr.mxu0 %v966
    %1137 = vmatpush1.msra.mxu0 %v965
    %1138 = vmatprep.subr.mxu0 %v970
    %1139 = vmatpush1.msra.mxu0 %v969
    %1140 = vmatprep.subr.mxu0 %v974
    %1141 = vmatpush1.msra.mxu0 %v973
    %1142 = vmatprep.subr.mxu0 %v978
    %1143 = vmatpush1.msra.mxu0 %v977
    %1144 = vmatprep.mubr.f32.mxu0 %v720
    %1145 = vmatmul.mubr.f32.gmra.mrb[0].mxu0 %v719
    %v1146 = vpop.f32.mrb[0].mxu0
    %v1147 = vadd.f32 %v1070, %v1146
    %v1148 = vpop.f32.mrb[0].mxu0
    %v1149 = vadd.f32 %v1072, %v1148
    %1150 = vmatprep.mubr.f32.mxu0 %v724
    %1151 = vmatmul.mubr.f32.gmra.mrb[0].mxu0 %v723
    %v1152 = vpop.f32.mrb[0].mxu0
    %v1153 = vadd.f32 %v1076, %v1152
    %v1154 = vpop.f32.mrb[0].mxu0
    %v1155 = vadd.f32 %v1078, %v1154
    %1156 = vdwg.mxu0
    %1157 = vmatprep.subr.mxu0 %v728
    %1158 = vmatpush1.msra.mxu0 %v727
    %1159 = vmatprep.subr.mxu0 %v732
    %1160 = vmatpush1.msra.mxu0 %v731
    %1161 = vmatprep.subr.mxu0 %v736
    %1162 = vmatpush1.msra.mxu0 %v735
    %1163 = vmatprep.subr.mxu0 %v740
    %1164 = vmatpush1.msra.mxu0 %v739
    %1165 = vmatprep.subr.mxu0 %v744
    %1166 = vmatpush1.msra.mxu0 %v743
    %1167 = vmatprep.subr.mxu0 %v748
    %1168 = vmatpush1.msra.mxu0 %v747
    %1169 = vmatprep.subr.mxu0 %v752
    %1170 = vmatpush1.msra.mxu0 %v751
    %1171 = vmatprep.subr.mxu0 %v756
    %1172 = vmatpush1.msra.mxu0 %v755
    %1173 = vmatprep.subr.mxu0 %v760
    %1174 = vmatpush1.msra.mxu0 %v759
    %1175 = vmatprep.subr.mxu0 %v764
    %1176 = vmatpush1.msra.mxu0 %v763
    %1177 = vmatprep.subr.mxu0 %v768
    %1178 = vmatpush1.msra.mxu0 %v767
    %1179 = vmatprep.subr.mxu0 %v772
    %1180 = vmatpush1.msra.mxu0 %v771
    %1181 = vmatprep.subr.mxu0 %v776
    %1182 = vmatpush1.msra.mxu0 %v775
    %1183 = vmatprep.subr.mxu0 %v780
    %1184 = vmatpush1.msra.mxu0 %v779
    %1185 = vmatprep.subr.mxu0 %v784
    %1186 = vmatpush1.msra.mxu0 %v783
    %1187 = vmatprep.subr.mxu0 %v788
    %1188 = vmatpush1.msra.mxu0 %v787
    %1189 = vmatprep.subr.mxu0 %v792
    %1190 = vmatpush1.msra.mxu0 %v791
    %1191 = vmatprep.subr.mxu0 %v796
    %1192 = vmatpush1.msra.mxu0 %v795
    %1193 = vmatprep.subr.mxu0 %v800
    %1194 = vmatpush1.msra.mxu0 %v799
    %1195 = vmatprep.subr.mxu0 %v804
    %1196 = vmatpush1.msra.mxu0 %v803
    %1197 = vmatprep.subr.mxu0 %v808
    %1198 = vmatpush1.msra.mxu0 %v807
    %1199 = vmatprep.subr.mxu0 %v812
    %1200 = vmatpush1.msra.mxu0 %v811
    %1201 = vmatprep.subr.mxu0 %v816
    %1202 = vmatpush1.msra.mxu0 %v815
    %1203 = vmatprep.subr.mxu0 %v820
    %1204 = vmatpush1.msra.mxu0 %v819
    %1205 = vmatprep.subr.mxu0 %v824
    %1206 = vmatpush1.msra.mxu0 %v823
    %1207 = vmatprep.subr.mxu0 %v828
    %1208 = vmatpush1.msra.mxu0 %v827
    %1209 = vmatprep.subr.mxu0 %v832
    %1210 = vmatpush1.msra.mxu0 %v831
    %1211 = vmatprep.subr.mxu0 %v836
    %1212 = vmatpush1.msra.mxu0 %v835
    %1213 = vmatprep.subr.mxu0 %v840
    %1214 = vmatpush1.msra.mxu0 %v839
    %1215 = vmatprep.subr.mxu0 %v844
    %1216 = vmatpush1.msra.mxu0 %v843
    %1217 = vmatprep.subr.mxu0 %v848
    %1218 = vmatpush1.msra.mxu0 %v847
    %1219 = vmatprep.subr.mxu0 %v852
    %1220 = vmatpush1.msra.mxu0 %v851
    %1221 = vmatprep.mubr.f32.mxu0 %v718
    %1222 = vmatmul.mubr.f32.gmra.mrb[0].mxu0 %v717
    %v1223 = vpop.f32.mrb[0].mxu0
    %v1224 = vadd.f32 %v994, %v1223
    %v1225 = vpop.f32.mrb[0].mxu0
    %v1226 = vadd.f32 %v998, %v1225
    %1227 = vmatprep.mubr.f32.mxu0 %v722
    %1228 = vmatmul.mubr.f32.gmra.mrb[0].mxu0 %v721
    %v1229 = vpop.f32.mrb[0].mxu0
    %v1230 = vadd.f32 %v994, %v1229
    %v1231 = vpop.f32.mrb[0].mxu0
    %v1232 = vadd.f32 %v998, %v1231
    %1233 = vdwg.mxu0
    %1234 = vmatprep.subr.mxu0 %v856
    %1235 = vmatpush1.msra.mxu0 %v855
    %1236 = vmatprep.subr.mxu0 %v860
    %1237 = vmatpush1.msra.mxu0 %v859
    %1238 = vmatprep.subr.mxu0 %v864
    %1239 = vmatpush1.msra.mxu0 %v863
    %1240 = vmatprep.subr.mxu0 %v868
    %1241 = vmatpush1.msra.mxu0 %v867
    %1242 = vmatprep.subr.mxu0 %v872
    %1243 = vmatpush1.msra.mxu0 %v871
    %1244 = vmatprep.subr.mxu0 %v876
    %1245 = vmatpush1.msra.mxu0 %v875
    %1246 = vmatprep.subr.mxu0 %v880
    %1247 = vmatpush1.msra.mxu0 %v879
    %1248 = vmatprep.subr.mxu0 %v884
    %1249 = vmatpush1.msra.mxu0 %v883
    %1250 = vmatprep.subr.mxu0 %v888
    %1251 = vmatpush1.msra.mxu0 %v887
    %1252 = vmatprep.subr.mxu0 %v892
    %1253 = vmatpush1.msra.mxu0 %v891
    %1254 = vmatprep.subr.mxu0 %v896
    %1255 = vmatpush1.msra.mxu0 %v895
    %1256 = vmatprep.subr.mxu0 %v900
    %1257 = vmatpush1.msra.mxu0 %v899
    %1258 = vmatprep.subr.mxu0 %v904
    %1259 = vmatpush1.msra.mxu0 %v903
    %1260 = vmatprep.subr.mxu0 %v908
    %1261 = vmatpush1.msra.mxu0 %v907
    %1262 = vmatprep.subr.mxu0 %v912
    %1263 = vmatpush1.msra.mxu0 %v911
    %1264 = vmatprep.subr.mxu0 %v916
    %1265 = vmatpush1.msra.mxu0 %v915
    %1266 = vmatprep.subr.mxu0 %v920
    %1267 = vmatpush1.msra.mxu0 %v919
    %1268 = vmatprep.subr.mxu0 %v924
    %1269 = vmatpush1.msra.mxu0 %v923
    %1270 = vmatprep.subr.mxu0 %v928
    %1271 = vmatpush1.msra.mxu0 %v927
    %1272 = vmatprep.subr.mxu0 %v932
    %1273 = vmatpush1.msra.mxu0 %v931
    %1274 = vmatprep.subr.mxu0 %v936
    %1275 = vmatpush1.msra.mxu0 %v935
    %1276 = vmatprep.subr.mxu0 %v940
    %1277 = vmatpush1.msra.mxu0 %v939
    %1278 = vmatprep.subr.mxu0 %v944
    %1279 = vmatpush1.msra.mxu0 %v943
    %1280 = vmatprep.subr.mxu0 %v948
    %1281 = vmatpush1.msra.mxu0 %v947
    %1282 = vmatprep.subr.mxu0 %v952
    %1283 = vmatpush1.msra.mxu0 %v951
    %1284 = vmatprep.subr.mxu0 %v956
    %1285 = vmatpush1.msra.mxu0 %v955
    %1286 = vmatprep.subr.mxu0 %v960
    %1287 = vmatpush1.msra.mxu0 %v959
    %1288 = vmatprep.subr.mxu0 %v964
    %1289 = vmatpush1.msra.mxu0 %v963
    %1290 = vmatprep.subr.mxu0 %v968
    %1291 = vmatpush1.msra.mxu0 %v967
    %1292 = vmatprep.subr.mxu0 %v972
    %1293 = vmatpush1.msra.mxu0 %v971
    %1294 = vmatprep.subr.mxu0 %v976
    %1295 = vmatpush1.msra.mxu0 %v975
    %1296 = vmatprep.subr.mxu0 %v980
    %1297 = vmatpush1.msra.mxu0 %v979
    %1298 = vmatprep.mubr.f32.mxu0 %v720
    %1299 = vmatmul.mubr.f32.gmra.mrb[0].mxu0 %v719
    %v1300 = vpop.f32.mrb[0].mxu0
    %v1301 = vadd.f32 %v1224, %v1300
    %v1302 = vpop.f32.mrb[0].mxu0
    %v1303 = vadd.f32 %v1226, %v1302
    %1304 = vmatprep.mubr.f32.mxu0 %v724
    %1305 = vmatmul.mubr.f32.gmra.mrb[0].mxu0 %v723
    %v1306 = vpop.f32.mrb[0].mxu0
    %v1307 = vadd.f32 %v1230, %v1306
    %v1308 = vpop.f32.mrb[0].mxu0
    %v1309 = vadd.f32 %v1232, %v1308
    %1310 = vdwg.mxu0
    %1311 = vst [vmem:[#allocation14] sm:$0xff] %v1147
    %1312 = vst [vmem:[#allocation14 + $0x8] sm:$0xff] %v1149
    %1313 = vst [vmem:[#allocation14 + $0x10] sm:$0xff] %v1301
    %1314 = vst [vmem:[#allocation14 + $0x18] sm:$0xff] %v1303
    %1315 = vst [vmem:[#allocation14 + $0x40] sm:$0xff] %v1153
    %1316 = vst [vmem:[#allocation14 + $0x48] sm:$0xff] %v1155
    %1317 = vst [vmem:[#allocation14 + $0x50] sm:$0xff] %v1307
    %1318 = vst [vmem:[#allocation14 + $0x58] sm:$0xff] %v1309
    %v1319 = vld [vmem:[#allocation7] sm:$0xff]
    %v1320 = vld [vmem:[#allocation7 + $0x8] sm:$0xff]
    %v1321 = vld [vmem:[#allocation7 + $0x10] sm:$0xff]
    %v1322 = vld [vmem:[#allocation7 + $0x18] sm:$0xff]
    %v1323 = vld [vmem:[#allocation7 + $0x20] sm:$0xff]
    %v1324 = vld [vmem:[#allocation7 + $0x28] sm:$0xff]
    %v1325 = vld [vmem:[#allocation7 + $0x30] sm:$0xff]
    %v1326 = vld [vmem:[#allocation7 + $0x38] sm:$0xff]
    %v1327 = vld [vmem:[#allocation11] sm:$0xff]
    %v1328 = vld [vmem:[#allocation11 + $0x8] sm:$0xff]
    %v1329 = vld [vmem:[#allocation11 + $0x10] sm:$0xff]
    %v1330 = vld [vmem:[#allocation11 + $0x18] sm:$0xff]
    %v1331 = vld [vmem:[#allocation11 + $0x20] sm:$0xff]
    %v1332 = vld [vmem:[#allocation11 + $0x28] sm:$0xff]
    %v1333 = vld [vmem:[#allocation11 + $0x30] sm:$0xff]
    %v1334 = vld [vmem:[#allocation11 + $0x38] sm:$0xff]
    %v1335 = vld [vmem:[#allocation11 + $0x40] sm:$0xff]
    %v1336 = vld [vmem:[#allocation11 + $0x48] sm:$0xff]
    %v1337 = vld [vmem:[#allocation11 + $0x50] sm:$0xff]
    %v1338 = vld [vmem:[#allocation11 + $0x58] sm:$0xff]
    %v1339 = vld [vmem:[#allocation11 + $0x60] sm:$0xff]
    %v1340 = vld [vmem:[#allocation11 + $0x68] sm:$0xff]
    %v1341 = vld [vmem:[#allocation11 + $0x70] sm:$0xff]
    %v1342 = vld [vmem:[#allocation11 + $0x78] sm:$0xff]
    %v1343 = vld [vmem:[#allocation11 + $0x80] sm:$0xff]
    %v1344 = vld [vmem:[#allocation11 + $0x88] sm:$0xff]
    %v1345 = vld [vmem:[#allocation11 + $0x90] sm:$0xff]
    %v1346 = vld [vmem:[#allocation11 + $0x98] sm:$0xff]
    %v1347 = vld [vmem:[#allocation11 + $0xa0] sm:$0xff]
    %v1348 = vld [vmem:[#allocation11 + $0xa8] sm:$0xff]
    %v1349 = vld [vmem:[#allocation11 + $0xb0] sm:$0xff]
    %v1350 = vld [vmem:[#allocation11 + $0xb8] sm:$0xff]
    %v1351 = vld [vmem:[#allocation11 + $0xc0] sm:$0xff]
    %v1352 = vld [vmem:[#allocation11 + $0xc8] sm:$0xff]
    %v1353 = vld [vmem:[#allocation11 + $0xd0] sm:$0xff]
    %v1354 = vld [vmem:[#allocation11 + $0xd8] sm:$0xff]
    %v1355 = vld [vmem:[#allocation11 + $0xe0] sm:$0xff]
    %v1356 = vld [vmem:[#allocation11 + $0xe8] sm:$0xff]
    %v1357 = vld [vmem:[#allocation11 + $0xf0] sm:$0xff]
    %v1358 = vld [vmem:[#allocation11 + $0xf8] sm:$0xff]
    %v1359 = vld [vmem:[#allocation11 + $0x100] sm:$0xff]
    %v1360 = vld [vmem:[#allocation11 + $0x108] sm:$0xff]
    %v1361 = vld [vmem:[#allocation11 + $0x110] sm:$0xff]
    %v1362 = vld [vmem:[#allocation11 + $0x118] sm:$0xff]
    %v1363 = vld [vmem:[#allocation11 + $0x120] sm:$0xff]
    %v1364 = vld [vmem:[#allocation11 + $0x128] sm:$0xff]
    %v1365 = vld [vmem:[#allocation11 + $0x130] sm:$0xff]
    %v1366 = vld [vmem:[#allocation11 + $0x138] sm:$0xff]
    %v1367 = vld [vmem:[#allocation11 + $0x140] sm:$0xff]
    %v1368 = vld [vmem:[#allocation11 + $0x148] sm:$0xff]
    %v1369 = vld [vmem:[#allocation11 + $0x150] sm:$0xff]
    %v1370 = vld [vmem:[#allocation11 + $0x158] sm:$0xff]
    %v1371 = vld [vmem:[#allocation11 + $0x160] sm:$0xff]
    %v1372 = vld [vmem:[#allocation11 + $0x168] sm:$0xff]
    %v1373 = vld [vmem:[#allocation11 + $0x170] sm:$0xff]
    %v1374 = vld [vmem:[#allocation11 + $0x178] sm:$0xff]
    %v1375 = vld [vmem:[#allocation11 + $0x180] sm:$0xff]
    %v1376 = vld [vmem:[#allocation11 + $0x188] sm:$0xff]
    %v1377 = vld [vmem:[#allocation11 + $0x190] sm:$0xff]
    %v1378 = vld [vmem:[#allocation11 + $0x198] sm:$0xff]
    %v1379 = vld [vmem:[#allocation11 + $0x1a0] sm:$0xff]
    %v1380 = vld [vmem:[#allocation11 + $0x1a8] sm:$0xff]
    %v1381 = vld [vmem:[#allocation11 + $0x1b0] sm:$0xff]
    %v1382 = vld [vmem:[#allocation11 + $0x1b8] sm:$0xff]
    %v1383 = vld [vmem:[#allocation11 + $0x1c0] sm:$0xff]
    %v1384 = vld [vmem:[#allocation11 + $0x1c8] sm:$0xff]
    %v1385 = vld [vmem:[#allocation11 + $0x1d0] sm:$0xff]
    %v1386 = vld [vmem:[#allocation11 + $0x1d8] sm:$0xff]
    %v1387 = vld [vmem:[#allocation11 + $0x1e0] sm:$0xff]
    %v1388 = vld [vmem:[#allocation11 + $0x1e8] sm:$0xff]
    %v1389 = vld [vmem:[#allocation11 + $0x1f0] sm:$0xff]
    %v1390 = vld [vmem:[#allocation11 + $0x1f8] sm:$0xff]
    %v1391 = vld [vmem:[#allocation11 + $0x200] sm:$0xff]
    %v1392 = vld [vmem:[#allocation11 + $0x208] sm:$0xff]
    %v1393 = vld [vmem:[#allocation11 + $0x210] sm:$0xff]
    %v1394 = vld [vmem:[#allocation11 + $0x218] sm:$0xff]
    %v1395 = vld [vmem:[#allocation11 + $0x220] sm:$0xff]
    %v1396 = vld [vmem:[#allocation11 + $0x228] sm:$0xff]
    %v1397 = vld [vmem:[#allocation11 + $0x230] sm:$0xff]
    %v1398 = vld [vmem:[#allocation11 + $0x238] sm:$0xff]
    %v1399 = vld [vmem:[#allocation11 + $0x240] sm:$0xff]
    %v1400 = vld [vmem:[#allocation11 + $0x248] sm:$0xff]
    %v1401 = vld [vmem:[#allocation11 + $0x250] sm:$0xff]
    %v1402 = vld [vmem:[#allocation11 + $0x258] sm:$0xff]
    %v1403 = vld [vmem:[#allocation11 + $0x260] sm:$0xff]
    %v1404 = vld [vmem:[#allocation11 + $0x268] sm:$0xff]
    %v1405 = vld [vmem:[#allocation11 + $0x270] sm:$0xff]
    %v1406 = vld [vmem:[#allocation11 + $0x278] sm:$0xff]
    %v1407 = vld [vmem:[#allocation11 + $0x280] sm:$0xff]
    %v1408 = vld [vmem:[#allocation11 + $0x288] sm:$0xff]
    %v1409 = vld [vmem:[#allocation11 + $0x290] sm:$0xff]
    %v1410 = vld [vmem:[#allocation11 + $0x298] sm:$0xff]
    %v1411 = vld [vmem:[#allocation11 + $0x2a0] sm:$0xff]
    %v1412 = vld [vmem:[#allocation11 + $0x2a8] sm:$0xff]
    %v1413 = vld [vmem:[#allocation11 + $0x2b0] sm:$0xff]
    %v1414 = vld [vmem:[#allocation11 + $0x2b8] sm:$0xff]
    %v1415 = vld [vmem:[#allocation11 + $0x2c0] sm:$0xff]
    %v1416 = vld [vmem:[#allocation11 + $0x2c8] sm:$0xff]
    %v1417 = vld [vmem:[#allocation11 + $0x2d0] sm:$0xff]
    %v1418 = vld [vmem:[#allocation11 + $0x2d8] sm:$0xff]
    %v1419 = vld [vmem:[#allocation11 + $0x2e0] sm:$0xff]
    %v1420 = vld [vmem:[#allocation11 + $0x2e8] sm:$0xff]
    %v1421 = vld [vmem:[#allocation11 + $0x2f0] sm:$0xff]
    %v1422 = vld [vmem:[#allocation11 + $0x2f8] sm:$0xff]
    %v1423 = vld [vmem:[#allocation11 + $0x300] sm:$0xff]
    %v1424 = vld [vmem:[#allocation11 + $0x308] sm:$0xff]
    %v1425 = vld [vmem:[#allocation11 + $0x310] sm:$0xff]
    %v1426 = vld [vmem:[#allocation11 + $0x318] sm:$0xff]
    %v1427 = vld [vmem:[#allocation11 + $0x320] sm:$0xff]
    %v1428 = vld [vmem:[#allocation11 + $0x328] sm:$0xff]
    %v1429 = vld [vmem:[#allocation11 + $0x330] sm:$0xff]
    %v1430 = vld [vmem:[#allocation11 + $0x338] sm:$0xff]
    %v1431 = vld [vmem:[#allocation11 + $0x340] sm:$0xff]
    %v1432 = vld [vmem:[#allocation11 + $0x348] sm:$0xff]
    %v1433 = vld [vmem:[#allocation11 + $0x350] sm:$0xff]
    %v1434 = vld [vmem:[#allocation11 + $0x358] sm:$0xff]
    %v1435 = vld [vmem:[#allocation11 + $0x360] sm:$0xff]
    %v1436 = vld [vmem:[#allocation11 + $0x368] sm:$0xff]
    %v1437 = vld [vmem:[#allocation11 + $0x370] sm:$0xff]
    %v1438 = vld [vmem:[#allocation11 + $0x378] sm:$0xff]
    %v1439 = vld [vmem:[#allocation11 + $0x380] sm:$0xff]
    %v1440 = vld [vmem:[#allocation11 + $0x388] sm:$0xff]
    %v1441 = vld [vmem:[#allocation11 + $0x390] sm:$0xff]
    %v1442 = vld [vmem:[#allocation11 + $0x398] sm:$0xff]
    %v1443 = vld [vmem:[#allocation11 + $0x3a0] sm:$0xff]
    %v1444 = vld [vmem:[#allocation11 + $0x3a8] sm:$0xff]
    %v1445 = vld [vmem:[#allocation11 + $0x3b0] sm:$0xff]
    %v1446 = vld [vmem:[#allocation11 + $0x3b8] sm:$0xff]
    %v1447 = vld [vmem:[#allocation11 + $0x3c0] sm:$0xff]
    %v1448 = vld [vmem:[#allocation11 + $0x3c8] sm:$0xff]
    %v1449 = vld [vmem:[#allocation11 + $0x3d0] sm:$0xff]
    %v1450 = vld [vmem:[#allocation11 + $0x3d8] sm:$0xff]
    %v1451 = vld [vmem:[#allocation11 + $0x3e0] sm:$0xff]
    %v1452 = vld [vmem:[#allocation11 + $0x3e8] sm:$0xff]
    %v1453 = vld [vmem:[#allocation11 + $0x3f0] sm:$0xff]
    %v1454 = vld [vmem:[#allocation11 + $0x3f8] sm:$0xff]
    %v1455 = vld [vmem:[#allocation11 + $0x400] sm:$0xff]
    %v1456 = vld [vmem:[#allocation11 + $0x408] sm:$0xff]
    %v1457 = vld [vmem:[#allocation11 + $0x410] sm:$0xff]
    %v1458 = vld [vmem:[#allocation11 + $0x418] sm:$0xff]
    %v1459 = vld [vmem:[#allocation11 + $0x420] sm:$0xff]
    %v1460 = vld [vmem:[#allocation11 + $0x428] sm:$0xff]
    %v1461 = vld [vmem:[#allocation11 + $0x430] sm:$0xff]
    %v1462 = vld [vmem:[#allocation11 + $0x438] sm:$0xff]
    %v1463 = vld [vmem:[#allocation11 + $0x440] sm:$0xff]
    %v1464 = vld [vmem:[#allocation11 + $0x448] sm:$0xff]
    %v1465 = vld [vmem:[#allocation11 + $0x450] sm:$0xff]
    %v1466 = vld [vmem:[#allocation11 + $0x458] sm:$0xff]
    %v1467 = vld [vmem:[#allocation11 + $0x460] sm:$0xff]
    %v1468 = vld [vmem:[#allocation11 + $0x468] sm:$0xff]
    %v1469 = vld [vmem:[#allocation11 + $0x470] sm:$0xff]
    %v1470 = vld [vmem:[#allocation11 + $0x478] sm:$0xff]
    %v1471 = vld [vmem:[#allocation11 + $0x480] sm:$0xff]
    %v1472 = vld [vmem:[#allocation11 + $0x488] sm:$0xff]
    %v1473 = vld [vmem:[#allocation11 + $0x490] sm:$0xff]
    %v1474 = vld [vmem:[#allocation11 + $0x498] sm:$0xff]
    %v1475 = vld [vmem:[#allocation11 + $0x4a0] sm:$0xff]
    %v1476 = vld [vmem:[#allocation11 + $0x4a8] sm:$0xff]
    %v1477 = vld [vmem:[#allocation11 + $0x4b0] sm:$0xff]
    %v1478 = vld [vmem:[#allocation11 + $0x4b8] sm:$0xff]
    %v1479 = vld [vmem:[#allocation11 + $0x4c0] sm:$0xff]
    %v1480 = vld [vmem:[#allocation11 + $0x4c8] sm:$0xff]
    %v1481 = vld [vmem:[#allocation11 + $0x4d0] sm:$0xff]
    %v1482 = vld [vmem:[#allocation11 + $0x4d8] sm:$0xff]
    %v1483 = vld [vmem:[#allocation11 + $0x4e0] sm:$0xff]
    %v1484 = vld [vmem:[#allocation11 + $0x4e8] sm:$0xff]
    %v1485 = vld [vmem:[#allocation11 + $0x4f0] sm:$0xff]
    %v1486 = vld [vmem:[#allocation11 + $0x4f8] sm:$0xff]
    %v1487 = vld [vmem:[#allocation11 + $0x500] sm:$0xff]
    %v1488 = vld [vmem:[#allocation11 + $0x508] sm:$0xff]
    %v1489 = vld [vmem:[#allocation11 + $0x510] sm:$0xff]
    %v1490 = vld [vmem:[#allocation11 + $0x518] sm:$0xff]
    %v1491 = vld [vmem:[#allocation11 + $0x520] sm:$0xff]
    %v1492 = vld [vmem:[#allocation11 + $0x528] sm:$0xff]
    %v1493 = vld [vmem:[#allocation11 + $0x530] sm:$0xff]
    %v1494 = vld [vmem:[#allocation11 + $0x538] sm:$0xff]
    %v1495 = vld [vmem:[#allocation11 + $0x540] sm:$0xff]
    %v1496 = vld [vmem:[#allocation11 + $0x548] sm:$0xff]
    %v1497 = vld [vmem:[#allocation11 + $0x550] sm:$0xff]
    %v1498 = vld [vmem:[#allocation11 + $0x558] sm:$0xff]
    %v1499 = vld [vmem:[#allocation11 + $0x560] sm:$0xff]
    %v1500 = vld [vmem:[#allocation11 + $0x568] sm:$0xff]
    %v1501 = vld [vmem:[#allocation11 + $0x570] sm:$0xff]
    %v1502 = vld [vmem:[#allocation11 + $0x578] sm:$0xff]
    %v1503 = vld [vmem:[#allocation11 + $0x580] sm:$0xff]
    %v1504 = vld [vmem:[#allocation11 + $0x588] sm:$0xff]
    %v1505 = vld [vmem:[#allocation11 + $0x590] sm:$0xff]
    %v1506 = vld [vmem:[#allocation11 + $0x598] sm:$0xff]
    %v1507 = vld [vmem:[#allocation11 + $0x5a0] sm:$0xff]
    %v1508 = vld [vmem:[#allocation11 + $0x5a8] sm:$0xff]
    %v1509 = vld [vmem:[#allocation11 + $0x5b0] sm:$0xff]
    %v1510 = vld [vmem:[#allocation11 + $0x5b8] sm:$0xff]
    %v1511 = vld [vmem:[#allocation11 + $0x5c0] sm:$0xff]
    %v1512 = vld [vmem:[#allocation11 + $0x5c8] sm:$0xff]
    %v1513 = vld [vmem:[#allocation11 + $0x5d0] sm:$0xff]
    %v1514 = vld [vmem:[#allocation11 + $0x5d8] sm:$0xff]
    %v1515 = vld [vmem:[#allocation11 + $0x5e0] sm:$0xff]
    %v1516 = vld [vmem:[#allocation11 + $0x5e8] sm:$0xff]
    %v1517 = vld [vmem:[#allocation11 + $0x5f0] sm:$0xff]
    %v1518 = vld [vmem:[#allocation11 + $0x5f8] sm:$0xff]
    %v1519 = vld [vmem:[#allocation11 + $0x600] sm:$0xff]
    %v1520 = vld [vmem:[#allocation11 + $0x608] sm:$0xff]
    %v1521 = vld [vmem:[#allocation11 + $0x610] sm:$0xff]
    %v1522 = vld [vmem:[#allocation11 + $0x618] sm:$0xff]
    %v1523 = vld [vmem:[#allocation11 + $0x620] sm:$0xff]
    %v1524 = vld [vmem:[#allocation11 + $0x628] sm:$0xff]
    %v1525 = vld [vmem:[#allocation11 + $0x630] sm:$0xff]
    %v1526 = vld [vmem:[#allocation11 + $0x638] sm:$0xff]
    %v1527 = vld [vmem:[#allocation11 + $0x640] sm:$0xff]
    %v1528 = vld [vmem:[#allocation11 + $0x648] sm:$0xff]
    %v1529 = vld [vmem:[#allocation11 + $0x650] sm:$0xff]
    %v1530 = vld [vmem:[#allocation11 + $0x658] sm:$0xff]
    %v1531 = vld [vmem:[#allocation11 + $0x660] sm:$0xff]
    %v1532 = vld [vmem:[#allocation11 + $0x668] sm:$0xff]
    %v1533 = vld [vmem:[#allocation11 + $0x670] sm:$0xff]
    %v1534 = vld [vmem:[#allocation11 + $0x678] sm:$0xff]
    %v1535 = vld [vmem:[#allocation11 + $0x680] sm:$0xff]
    %v1536 = vld [vmem:[#allocation11 + $0x688] sm:$0xff]
    %v1537 = vld [vmem:[#allocation11 + $0x690] sm:$0xff]
    %v1538 = vld [vmem:[#allocation11 + $0x698] sm:$0xff]
    %v1539 = vld [vmem:[#allocation11 + $0x6a0] sm:$0xff]
    %v1540 = vld [vmem:[#allocation11 + $0x6a8] sm:$0xff]
    %v1541 = vld [vmem:[#allocation11 + $0x6b0] sm:$0xff]
    %v1542 = vld [vmem:[#allocation11 + $0x6b8] sm:$0xff]
    %v1543 = vld [vmem:[#allocation11 + $0x6c0] sm:$0xff]
    %v1544 = vld [vmem:[#allocation11 + $0x6c8] sm:$0xff]
    %v1545 = vld [vmem:[#allocation11 + $0x6d0] sm:$0xff]
    %v1546 = vld [vmem:[#allocation11 + $0x6d8] sm:$0xff]
    %v1547 = vld [vmem:[#allocation11 + $0x6e0] sm:$0xff]
    %v1548 = vld [vmem:[#allocation11 + $0x6e8] sm:$0xff]
    %v1549 = vld [vmem:[#allocation11 + $0x6f0] sm:$0xff]
    %v1550 = vld [vmem:[#allocation11 + $0x6f8] sm:$0xff]
    %v1551 = vld [vmem:[#allocation11 + $0x700] sm:$0xff]
    %v1552 = vld [vmem:[#allocation11 + $0x708] sm:$0xff]
    %v1553 = vld [vmem:[#allocation11 + $0x710] sm:$0xff]
    %v1554 = vld [vmem:[#allocation11 + $0x718] sm:$0xff]
    %v1555 = vld [vmem:[#allocation11 + $0x720] sm:$0xff]
    %v1556 = vld [vmem:[#allocation11 + $0x728] sm:$0xff]
    %v1557 = vld [vmem:[#allocation11 + $0x730] sm:$0xff]
    %v1558 = vld [vmem:[#allocation11 + $0x738] sm:$0xff]
    %v1559 = vld [vmem:[#allocation11 + $0x740] sm:$0xff]
    %v1560 = vld [vmem:[#allocation11 + $0x748] sm:$0xff]
    %v1561 = vld [vmem:[#allocation11 + $0x750] sm:$0xff]
    %v1562 = vld [vmem:[#allocation11 + $0x758] sm:$0xff]
    %v1563 = vld [vmem:[#allocation11 + $0x760] sm:$0xff]
    %v1564 = vld [vmem:[#allocation11 + $0x768] sm:$0xff]
    %v1565 = vld [vmem:[#allocation11 + $0x770] sm:$0xff]
    %v1566 = vld [vmem:[#allocation11 + $0x778] sm:$0xff]
    %v1567 = vld [vmem:[#allocation11 + $0x780] sm:$0xff]
    %v1568 = vld [vmem:[#allocation11 + $0x788] sm:$0xff]
    %v1569 = vld [vmem:[#allocation11 + $0x790] sm:$0xff]
    %v1570 = vld [vmem:[#allocation11 + $0x798] sm:$0xff]
    %v1571 = vld [vmem:[#allocation11 + $0x7a0] sm:$0xff]
    %v1572 = vld [vmem:[#allocation11 + $0x7a8] sm:$0xff]
    %v1573 = vld [vmem:[#allocation11 + $0x7b0] sm:$0xff]
    %v1574 = vld [vmem:[#allocation11 + $0x7b8] sm:$0xff]
    %v1575 = vld [vmem:[#allocation11 + $0x7c0] sm:$0xff]
    %v1576 = vld [vmem:[#allocation11 + $0x7c8] sm:$0xff]
    %v1577 = vld [vmem:[#allocation11 + $0x7d0] sm:$0xff]
    %v1578 = vld [vmem:[#allocation11 + $0x7d8] sm:$0xff]
    %v1579 = vld [vmem:[#allocation11 + $0x7e0] sm:$0xff]
    %v1580 = vld [vmem:[#allocation11 + $0x7e8] sm:$0xff]
    %v1581 = vld [vmem:[#allocation11 + $0x7f0] sm:$0xff]
    %v1582 = vld [vmem:[#allocation11 + $0x7f8] sm:$0xff]
    %v1583 = vld [vmem:[%s7 + $0x4] sm:$0xf]
    %v1585 = vlaneseq
    %v1586 = vshrl.u32 %v1585, 7
    %v1587 = vsub.s32 0, %v1586
    %v1588 = vrot.slane %v1583, %v1587
    %v1589 = vlaneseq
    %v1590 = vshrl.u32 %v1589, 7
    %v1591 = vsub.s32 1, %v1590
    %v1592 = vrot.slane %v1583, %v1591
    %v1593 = vlaneseq
    %v1594 = vshrl.u32 %v1593, 7
    %v1595 = vsub.s32 2, %v1594
    %v1596 = vrot.slane %v1583, %v1595
    %v1597 = vlaneseq
    %v1598 = vshrl.u32 %v1597, 7
    %v1599 = vsub.s32 3, %v1598
    %v1600 = vrot.slane %v1583, %v1599
    %1605 = vmatprep.subr.mxu0 %v1328
    %1606 = vmatpush1.msra.mxu0 %v1327
    %1607 = vmatprep.subr.mxu0 %v1332
    %1608 = vmatpush1.msra.mxu0 %v1331
    %1609 = vmatprep.subr.mxu0 %v1336
    %1610 = vmatpush1.msra.mxu0 %v1335
    %1611 = vmatprep.subr.mxu0 %v1340
    %1612 = vmatpush1.msra.mxu0 %v1339
    %1613 = vmatprep.subr.mxu0 %v1344
    %1614 = vmatpush1.msra.mxu0 %v1343
    %1615 = vmatprep.subr.mxu0 %v1348
    %1616 = vmatpush1.msra.mxu0 %v1347
    %1617 = vmatprep.subr.mxu0 %v1352
    %1618 = vmatpush1.msra.mxu0 %v1351
    %1619 = vmatprep.subr.mxu0 %v1356
    %1620 = vmatpush1.msra.mxu0 %v1355
    %1621 = vmatprep.subr.mxu0 %v1360
    %1622 = vmatpush1.msra.mxu0 %v1359
    %1623 = vmatprep.subr.mxu0 %v1364
    %1624 = vmatpush1.msra.mxu0 %v1363
    %1625 = vmatprep.subr.mxu0 %v1368
    %1626 = vmatpush1.msra.mxu0 %v1367
    %1627 = vmatprep.subr.mxu0 %v1372
    %1628 = vmatpush1.msra.mxu0 %v1371
    %1629 = vmatprep.subr.mxu0 %v1376
    %1630 = vmatpush1.msra.mxu0 %v1375
    %1631 = vmatprep.subr.mxu0 %v1380
    %1632 = vmatpush1.msra.mxu0 %v1379
    %1633 = vmatprep.subr.mxu0 %v1384
    %1634 = vmatpush1.msra.mxu0 %v1383
    %1635 = vmatprep.subr.mxu0 %v1388
    %1636 = vmatpush1.msra.mxu0 %v1387
    %1637 = vmatprep.subr.mxu0 %v1392
    %1638 = vmatpush1.msra.mxu0 %v1391
    %1639 = vmatprep.subr.mxu0 %v1396
    %1640 = vmatpush1.msra.mxu0 %v1395
    %1641 = vmatprep.subr.mxu0 %v1400
    %1642 = vmatpush1.msra.mxu0 %v1399
    %1643 = vmatprep.subr.mxu0 %v1404
    %1644 = vmatpush1.msra.mxu0 %v1403
    %1645 = vmatprep.subr.mxu0 %v1408
    %1646 = vmatpush1.msra.mxu0 %v1407
    %1647 = vmatprep.subr.mxu0 %v1412
    %1648 = vmatpush1.msra.mxu0 %v1411
    %1649 = vmatprep.subr.mxu0 %v1416
    %1650 = vmatpush1.msra.mxu0 %v1415
    %1651 = vmatprep.subr.mxu0 %v1420
    %1652 = vmatpush1.msra.mxu0 %v1419
    %1653 = vmatprep.subr.mxu0 %v1424
    %1654 = vmatpush1.msra.mxu0 %v1423
    %1655 = vmatprep.subr.mxu0 %v1428
    %1656 = vmatpush1.msra.mxu0 %v1427
    %1657 = vmatprep.subr.mxu0 %v1432
    %1658 = vmatpush1.msra.mxu0 %v1431
    %1659 = vmatprep.subr.mxu0 %v1436
    %1660 = vmatpush1.msra.mxu0 %v1435
    %1661 = vmatprep.subr.mxu0 %v1440
    %1662 = vmatpush1.msra.mxu0 %v1439
    %1663 = vmatprep.subr.mxu0 %v1444
    %1664 = vmatpush1.msra.mxu0 %v1443
    %1665 = vmatprep.subr.mxu0 %v1448
    %1666 = vmatpush1.msra.mxu0 %v1447
    %1667 = vmatprep.subr.mxu0 %v1452
    %1668 = vmatpush1.msra.mxu0 %v1451
    %1669 = vmatprep.mubr.f32.mxu0 %v1320
    %1670 = vmatmul.mubr.f32.gmra.mrb[0].mxu0 %v1319
    %v1671 = vpop.f32.mrb[0].mxu0
    %v1672 = vadd.f32 %v1588, %v1671
    %v1673 = vpop.f32.mrb[0].mxu0
    %v1674 = vadd.f32 %v1592, %v1673
    %1675 = vmatprep.mubr.f32.mxu0 %v1324
    %1676 = vmatmul.mubr.f32.gmra.mrb[0].mxu0 %v1323
    %v1677 = vpop.f32.mrb[0].mxu0
    %v1678 = vadd.f32 %v1588, %v1677
    %v1679 = vpop.f32.mrb[0].mxu0
    %v1680 = vadd.f32 %v1592, %v1679
    %1681 = vdwg.mxu0
    %1682 = vmatprep.subr.mxu0 %v1456
    %1683 = vmatpush1.msra.mxu0 %v1455
    %1684 = vmatprep.subr.mxu0 %v1460
    %1685 = vmatpush1.msra.mxu0 %v1459
    %1686 = vmatprep.subr.mxu0 %v1464
    %1687 = vmatpush1.msra.mxu0 %v1463
    %1688 = vmatprep.subr.mxu0 %v1468
    %1689 = vmatpush1.msra.mxu0 %v1467
    %1690 = vmatprep.subr.mxu0 %v1472
    %1691 = vmatpush1.msra.mxu0 %v1471
    %1692 = vmatprep.subr.mxu0 %v1476
    %1693 = vmatpush1.msra.mxu0 %v1475
    %1694 = vmatprep.subr.mxu0 %v1480
    %1695 = vmatpush1.msra.mxu0 %v1479
    %1696 = vmatprep.subr.mxu0 %v1484
    %1697 = vmatpush1.msra.mxu0 %v1483
    %1698 = vmatprep.subr.mxu0 %v1488
    %1699 = vmatpush1.msra.mxu0 %v1487
    %1700 = vmatprep.subr.mxu0 %v1492
    %1701 = vmatpush1.msra.mxu0 %v1491
    %1702 = vmatprep.subr.mxu0 %v1496
    %1703 = vmatpush1.msra.mxu0 %v1495
    %1704 = vmatprep.subr.mxu0 %v1500
    %1705 = vmatpush1.msra.mxu0 %v1499
    %1706 = vmatprep.subr.mxu0 %v1504
    %1707 = vmatpush1.msra.mxu0 %v1503
    %1708 = vmatprep.subr.mxu0 %v1508
    %1709 = vmatpush1.msra.mxu0 %v1507
    %1710 = vmatprep.subr.mxu0 %v1512
    %1711 = vmatpush1.msra.mxu0 %v1511
    %1712 = vmatprep.subr.mxu0 %v1516
    %1713 = vmatpush1.msra.mxu0 %v1515
    %1714 = vmatprep.subr.mxu0 %v1520
    %1715 = vmatpush1.msra.mxu0 %v1519
    %1716 = vmatprep.subr.mxu0 %v1524
    %1717 = vmatpush1.msra.mxu0 %v1523
    %1718 = vmatprep.subr.mxu0 %v1528
    %1719 = vmatpush1.msra.mxu0 %v1527
    %1720 = vmatprep.subr.mxu0 %v1532
    %1721 = vmatpush1.msra.mxu0 %v1531
    %1722 = vmatprep.subr.mxu0 %v1536
    %1723 = vmatpush1.msra.mxu0 %v1535
    %1724 = vmatprep.subr.mxu0 %v1540
    %1725 = vmatpush1.msra.mxu0 %v1539
    %1726 = vmatprep.subr.mxu0 %v1544
    %1727 = vmatpush1.msra.mxu0 %v1543
    %1728 = vmatprep.subr.mxu0 %v1548
    %1729 = vmatpush1.msra.mxu0 %v1547
    %1730 = vmatprep.subr.mxu0 %v1552
    %1731 = vmatpush1.msra.mxu0 %v1551
    %1732 = vmatprep.subr.mxu0 %v1556
    %1733 = vmatpush1.msra.mxu0 %v1555
    %1734 = vmatprep.subr.mxu0 %v1560
    %1735 = vmatpush1.msra.mxu0 %v1559
    %1736 = vmatprep.subr.mxu0 %v1564
    %1737 = vmatpush1.msra.mxu0 %v1563
    %1738 = vmatprep.subr.mxu0 %v1568
    %1739 = vmatpush1.msra.mxu0 %v1567
    %1740 = vmatprep.subr.mxu0 %v1572
    %1741 = vmatpush1.msra.mxu0 %v1571
    %1742 = vmatprep.subr.mxu0 %v1576
    %1743 = vmatpush1.msra.mxu0 %v1575
    %1744 = vmatprep.subr.mxu0 %v1580
    %1745 = vmatpush1.msra.mxu0 %v1579
    %1746 = vmatprep.mubr.f32.mxu0 %v1322
    %1747 = vmatmul.mubr.f32.gmra.mrb[0].mxu0 %v1321
    %v1748 = vpop.f32.mrb[0].mxu0
    %v1749 = vadd.f32 %v1672, %v1748
    %v1750 = vpop.f32.mrb[0].mxu0
    %v1751 = vadd.f32 %v1674, %v1750
    %1752 = vmatprep.mubr.f32.mxu0 %v1326
    %1753 = vmatmul.mubr.f32.gmra.mrb[0].mxu0 %v1325
    %v1754 = vpop.f32.mrb[0].mxu0
    %v1755 = vadd.f32 %v1678, %v1754
    %v1756 = vpop.f32.mrb[0].mxu0
    %v1757 = vadd.f32 %v1680, %v1756
    %1758 = vdwg.mxu0
    %1759 = vmatprep.subr.mxu0 %v1330
    %1760 = vmatpush1.msra.mxu0 %v1329
    %1761 = vmatprep.subr.mxu0 %v1334
    %1762 = vmatpush1.msra.mxu0 %v1333
    %1763 = vmatprep.subr.mxu0 %v1338
    %1764 = vmatpush1.msra.mxu0 %v1337
    %1765 = vmatprep.subr.mxu0 %v1342
    %1766 = vmatpush1.msra.mxu0 %v1341
    %1767 = vmatprep.subr.mxu0 %v1346
    %1768 = vmatpush1.msra.mxu0 %v1345
    %1769 = vmatprep.subr.mxu0 %v1350
    %1770 = vmatpush1.msra.mxu0 %v1349
    %1771 = vmatprep.subr.mxu0 %v1354
    %1772 = vmatpush1.msra.mxu0 %v1353
    %1773 = vmatprep.subr.mxu0 %v1358
    %1774 = vmatpush1.msra.mxu0 %v1357
    %1775 = vmatprep.subr.mxu0 %v1362
    %1776 = vmatpush1.msra.mxu0 %v1361
    %1777 = vmatprep.subr.mxu0 %v1366
    %1778 = vmatpush1.msra.mxu0 %v1365
    %1779 = vmatprep.subr.mxu0 %v1370
    %1780 = vmatpush1.msra.mxu0 %v1369
    %1781 = vmatprep.subr.mxu0 %v1374
    %1782 = vmatpush1.msra.mxu0 %v1373
    %1783 = vmatprep.subr.mxu0 %v1378
    %1784 = vmatpush1.msra.mxu0 %v1377
    %1785 = vmatprep.subr.mxu0 %v1382
    %1786 = vmatpush1.msra.mxu0 %v1381
    %1787 = vmatprep.subr.mxu0 %v1386
    %1788 = vmatpush1.msra.mxu0 %v1385
    %1789 = vmatprep.subr.mxu0 %v1390
    %1790 = vmatpush1.msra.mxu0 %v1389
    %1791 = vmatprep.subr.mxu0 %v1394
    %1792 = vmatpush1.msra.mxu0 %v1393
    %1793 = vmatprep.subr.mxu0 %v1398
    %1794 = vmatpush1.msra.mxu0 %v1397
    %1795 = vmatprep.subr.mxu0 %v1402
    %1796 = vmatpush1.msra.mxu0 %v1401
    %1797 = vmatprep.subr.mxu0 %v1406
    %1798 = vmatpush1.msra.mxu0 %v1405
    %1799 = vmatprep.subr.mxu0 %v1410
    %1800 = vmatpush1.msra.mxu0 %v1409
    %1801 = vmatprep.subr.mxu0 %v1414
    %1802 = vmatpush1.msra.mxu0 %v1413
    %1803 = vmatprep.subr.mxu0 %v1418
    %1804 = vmatpush1.msra.mxu0 %v1417
    %1805 = vmatprep.subr.mxu0 %v1422
    %1806 = vmatpush1.msra.mxu0 %v1421
    %1807 = vmatprep.subr.mxu0 %v1426
    %1808 = vmatpush1.msra.mxu0 %v1425
    %1809 = vmatprep.subr.mxu0 %v1430
    %1810 = vmatpush1.msra.mxu0 %v1429
    %1811 = vmatprep.subr.mxu0 %v1434
    %1812 = vmatpush1.msra.mxu0 %v1433
    %1813 = vmatprep.subr.mxu0 %v1438
    %1814 = vmatpush1.msra.mxu0 %v1437
    %1815 = vmatprep.subr.mxu0 %v1442
    %1816 = vmatpush1.msra.mxu0 %v1441
    %1817 = vmatprep.subr.mxu0 %v1446
    %1818 = vmatpush1.msra.mxu0 %v1445
    %1819 = vmatprep.subr.mxu0 %v1450
    %1820 = vmatpush1.msra.mxu0 %v1449
    %1821 = vmatprep.subr.mxu0 %v1454
    %1822 = vmatpush1.msra.mxu0 %v1453
    %1823 = vmatprep.mubr.f32.mxu0 %v1320
    %1824 = vmatmul.mubr.f32.gmra.mrb[0].mxu0 %v1319
    %v1825 = vpop.f32.mrb[0].mxu0
    %v1826 = vadd.f32 %v1596, %v1825
    %v1827 = vpop.f32.mrb[0].mxu0
    %v1828 = vadd.f32 %v1600, %v1827
    %1829 = vmatprep.mubr.f32.mxu0 %v1324
    %1830 = vmatmul.mubr.f32.gmra.mrb[0].mxu0 %v1323
    %v1831 = vpop.f32.mrb[0].mxu0
    %v1832 = vadd.f32 %v1596, %v1831
    %v1833 = vpop.f32.mrb[0].mxu0
    %v1834 = vadd.f32 %v1600, %v1833
    %1835 = vdwg.mxu0
    %1836 = vmatprep.subr.mxu0 %v1458
    %1837 = vmatpush1.msra.mxu0 %v1457
    %1838 = vmatprep.subr.mxu0 %v1462
    %1839 = vmatpush1.msra.mxu0 %v1461
    %1840 = vmatprep.subr.mxu0 %v1466
    %1841 = vmatpush1.msra.mxu0 %v1465
    %1842 = vmatprep.subr.mxu0 %v1470
    %1843 = vmatpush1.msra.mxu0 %v1469
    %1844 = vmatprep.subr.mxu0 %v1474
    %1845 = vmatpush1.msra.mxu0 %v1473
    %1846 = vmatprep.subr.mxu0 %v1478
    %1847 = vmatpush1.msra.mxu0 %v1477
    %1848 = vmatprep.subr.mxu0 %v1482
    %1849 = vmatpush1.msra.mxu0 %v1481
    %1850 = vmatprep.subr.mxu0 %v1486
    %1851 = vmatpush1.msra.mxu0 %v1485
    %1852 = vmatprep.subr.mxu0 %v1490
    %1853 = vmatpush1.msra.mxu0 %v1489
    %1854 = vmatprep.subr.mxu0 %v1494
    %1855 = vmatpush1.msra.mxu0 %v1493
    %1856 = vmatprep.subr.mxu0 %v1498
    %1857 = vmatpush1.msra.mxu0 %v1497
    %1858 = vmatprep.subr.mxu0 %v1502
    %1859 = vmatpush1.msra.mxu0 %v1501
    %1860 = vmatprep.subr.mxu0 %v1506
    %1861 = vmatpush1.msra.mxu0 %v1505
    %1862 = vmatprep.subr.mxu0 %v1510
    %1863 = vmatpush1.msra.mxu0 %v1509
    %1864 = vmatprep.subr.mxu0 %v1514
    %1865 = vmatpush1.msra.mxu0 %v1513
    %1866 = vmatprep.subr.mxu0 %v1518
    %1867 = vmatpush1.msra.mxu0 %v1517
    %1868 = vmatprep.subr.mxu0 %v1522
    %1869 = vmatpush1.msra.mxu0 %v1521
    %1870 = vmatprep.subr.mxu0 %v1526
    %1871 = vmatpush1.msra.mxu0 %v1525
    %1872 = vmatprep.subr.mxu0 %v1530
    %1873 = vmatpush1.msra.mxu0 %v1529
    %1874 = vmatprep.subr.mxu0 %v1534
    %1875 = vmatpush1.msra.mxu0 %v1533
    %1876 = vmatprep.subr.mxu0 %v1538
    %1877 = vmatpush1.msra.mxu0 %v1537
    %1878 = vmatprep.subr.mxu0 %v1542
    %1879 = vmatpush1.msra.mxu0 %v1541
    %1880 = vmatprep.subr.mxu0 %v1546
    %1881 = vmatpush1.msra.mxu0 %v1545
    %1882 = vmatprep.subr.mxu0 %v1550
    %1883 = vmatpush1.msra.mxu0 %v1549
    %1884 = vmatprep.subr.mxu0 %v1554
    %1885 = vmatpush1.msra.mxu0 %v1553
    %1886 = vmatprep.subr.mxu0 %v1558
    %1887 = vmatpush1.msra.mxu0 %v1557
    %1888 = vmatprep.subr.mxu0 %v1562
    %1889 = vmatpush1.msra.mxu0 %v1561
    %1890 = vmatprep.subr.mxu0 %v1566
    %1891 = vmatpush1.msra.mxu0 %v1565
    %1892 = vmatprep.subr.mxu0 %v1570
    %1893 = vmatpush1.msra.mxu0 %v1569
    %1894 = vmatprep.subr.mxu0 %v1574
    %1895 = vmatpush1.msra.mxu0 %v1573
    %1896 = vmatprep.subr.mxu0 %v1578
    %1897 = vmatpush1.msra.mxu0 %v1577
    %1898 = vmatprep.subr.mxu0 %v1582
    %1899 = vmatpush1.msra.mxu0 %v1581
    %1900 = vmatprep.mubr.f32.mxu0 %v1322
    %1901 = vmatmul.mubr.f32.gmra.mrb[0].mxu0 %v1321
    %v1902 = vpop.f32.mrb[0].mxu0
    %v1903 = vadd.f32 %v1826, %v1902
    %v1904 = vpop.f32.mrb[0].mxu0
    %v1905 = vadd.f32 %v1828, %v1904
    %1906 = vmatprep.mubr.f32.mxu0 %v1326
    %1907 = vmatmul.mubr.f32.gmra.mrb[0].mxu0 %v1325
    %v1908 = vpop.f32.mrb[0].mxu0
    %v1909 = vadd.f32 %v1832, %v1908
    %v1910 = vpop.f32.mrb[0].mxu0
    %v1911 = vadd.f32 %v1834, %v1910
    %1912 = vdwg.mxu0
    %1913 = vst [vmem:[#allocation14 + $0x20] sm:$0xff] %v1749
    %1914 = vst [vmem:[#allocation14 + $0x28] sm:$0xff] %v1751
    %1915 = vst [vmem:[#allocation14 + $0x30] sm:$0xff] %v1903
    %1916 = vst [vmem:[#allocation14 + $0x38] sm:$0xff] %v1905
    %1917 = vst [vmem:[#allocation14 + $0x60] sm:$0xff] %v1755
    %1918 = vst [vmem:[#allocation14 + $0x68] sm:$0xff] %v1757
    %1919 = vst [vmem:[#allocation14 + $0x70] sm:$0xff] %v1909
    %1920 = vst [vmem:[#allocation14 + $0x78] sm:$0xff] %v1911
    // Predicated region
    $region58: #{tpu_custom_call.1} parent=1 // pred_check
      _
    $region59: #{tpu_custom_call.1} parent=1 // pred_check_branch
      %1922 = sbr.rel (0) target = $region61
    $region60: #{tpu_custom_call.1} parent=1 // pred_region
      %s1924 = ssub.s32 1024, 1024
      %1925 = vsyncadd [#allocation4], %s1924
      %s1926 = sshll.u32 [#allocation13], 4
      %s1927 = int_to_ptr.vmem [resolvable:$true] %s1926
      %1932 = dma.vmem_to_hbm [thread:$0]  %s1927, 1024, %s8, [#allocation4], 512, 512, 32
    $region61: #{tpu_custom_call.1} parent=1 // pred_fallthru
      _
    // Predicated region
    $region62: #{tpu_custom_call.1} parent=1 // pred_check
      _
    $region63: #{tpu_custom_call.1} parent=1 // pred_check_branch
      %1934 = sbr.rel (0) target = $region65
    $region64: #{tpu_custom_call.1} parent=1 // pred_region
      %s1936 = ssub.s32 2048, 2048
      %1937 = vsyncadd [#allocation15], %s1936
      %s1938 = sshll.u32 [#allocation14], 4
      %s1939 = int_to_ptr.vmem [resolvable:$true] %s1938
      %1944 = dma.vmem_to_hbm [thread:$0]  %s1939, 2048, %s9, [#allocation15], 1024, 1024, 64
    $region65: #{tpu_custom_call.1} parent=1 // pred_fallthru
      _
    // Predicated region
    $region66: #{tpu_custom_call.1} parent=1 // pred_check
      _
    $region67: #{tpu_custom_call.1} parent=1 // pred_check_branch
      %1946 = sbr.rel (0) target = $region69
    $region68: #{tpu_custom_call.1} parent=1 // pred_region
      %1947 = dma.done [#allocation4], 1024
    $region69: #{tpu_custom_call.1} parent=1 // pred_fallthru
      _
    // Predicated region
    $region70: #{tpu_custom_call.1} parent=1 // pred_check
      _
    $region71: #{tpu_custom_call.1} parent=1 // pred_check_branch
      %1949 = sbr.rel (0) target = $region73
    $region72: #{tpu_custom_call.1} parent=1 // pred_region
      %1950 = dma.done [#allocation15], 2048
    $region73: #{tpu_custom_call.1} parent=1 // pred_fallthru
      _
    %1951 = vsyncpa [#allocation3], 1
    %1952 = vsyncpa [#allocation6], 1
    %1953 = vsyncpa [#allocation9], 1
    %1954 = vsyncpa [#allocation12], 1
    %1955 = vsyncpa [#allocation4], 1
    %1956 = vsyncpa [#allocation15], 1

</llo_original>
